<compile_context>
chip_gen: v7x
topology: tpu7x:2x2x1
jax: 0.10.0
libtpu: 0.0.40
codegen_flags: <defaults>
</compile_context>

<pallas_src>
import functools

import jax
import jax.numpy as jnp
import numpy as np
from jax import lax
from jax.experimental import pallas as pl
from jax.experimental.pallas import tpu as pltpu


def _round_up(x, m):
    return ((x + m - 1) // m) * m


def _resnet1d_kernel(n_depth, t_valid_len, t_pad_len,
                     x_ref, w1_ref, b_ref, ws_ref, w2_ref, o_ref):
    """One lane tile (whole batch elements folded on lanes) per grid step."""
    C = ws_ref.shape[1]
    W = x_ref.shape[1]

    # Lane-index masks (computed once per tile; reused by every depth block).
    t_idx = lax.broadcasted_iota(jnp.int32, (1, W), 1)
    t_mod = t_idx % t_pad_len                  # position within one batch element
    left_edge = t_mod == 0                     # t-1 tap reads the conv's zero pad
    # t+1 tap reads the conv's zero pad (t == Tp-1 kills the wrap between folded
    # elements) or, when T < Tp, the garbage carried in padded time columns
    # (t == T-1 is the only path by which pad garbage reaches a valid column).
    if t_pad_len == t_valid_len:
        right_edge = t_mod == (t_pad_len - 1)
    else:
        right_edge = jnp.logical_or(t_mod == (t_pad_len - 1),
                                    t_mod == (t_valid_len - 1))

    x0 = x_ref[...]                            # (C, W) f32 residual stream

    def block(d, x):
        h16 = jnp.maximum(x, 0.0).astype(jnp.bfloat16)    # activation1 = ReLU
        b_all = b_ref[d]                                  # (C, 3) f32 biases

        # conv1 (k=3, pad=1): single MXU matmul, taps stacked along M, then
        # the t-1 / t+1 tap outputs are shifted on the XLU (pltpu.roll) and
        # their boundary columns zeroed.
        y_all = jnp.dot(w1_ref[d], h16,
                        preferred_element_type=jnp.float32)   # (3C, W) f32
        p = y_all[0:C, :]                       # tap applied to h[t-1]
        c = y_all[C:2 * C, :]                   # tap applied to h[t]
        n = y_all[2 * C:3 * C, :]               # tap applied to h[t+1]
        p = jnp.where(left_edge, 0.0, pltpu.roll(p, 1, axis=1))
        n = jnp.where(right_edge, 0.0, pltpu.roll(n, W - 1, axis=1))
        y1 = p + c + n + b_all[:, 0:1]

        # conv_skip (1x1 conv == channel matmul) + ReLU
        skip = jnp.dot(ws_ref[d], y1.astype(jnp.bfloat16),
                       preferred_element_type=jnp.float32)
        skip = jnp.maximum(skip + b_all[:, 1:2], 0.0)

        # conv2 (1x1 conv) + bias + residual, fused in one elementwise pass
        y2 = jnp.dot(w2_ref[d], skip.astype(jnp.bfloat16),
                     preferred_element_type=jnp.float32)
        return y2 + b_all[:, 2:3] + x

    # Unroll short depth stacks (cross-block scheduling visibility); keep the
    # loop rolled for very deep stacks to bound vreg pressure.
    o_ref[...] = lax.fori_loop(0, n_depth, block, x0, unroll=(n_depth <= 8))


def pack_params(params):
    """Pad channels to a multiple of 8, cast MXU weights to bf16 and pack.

    Call once and reuse across forward calls."""
    D, _, C, _ = params["w1"].shape
    Cp = _round_up(C, 8)
    dC = Cp - C
    # conv1 taps stacked along M: (D, 3, Cp, Cp) -> (D, 3*Cp, Cp)
    w1 = jnp.pad(params["w1"], ((0, 0), (0, 0), (0, dC), (0, dC)))
    w1s = w1.reshape(D, 3 * Cp, Cp).astype(jnp.bfloat16)
    ws = jnp.pad(params["ws"], ((0, 0), (0, dC), (0, dC))).astype(jnp.bfloat16)
    w2 = jnp.pad(params["w2"], ((0, 0), (0, dC), (0, dC))).astype(jnp.bfloat16)
    # Pack the three (D, C) biases into one (D, Cp, 3) array (less lane padding).
    b = jnp.stack([params["b1"], params["bs"], params["b2"]], axis=-1)
    b = jnp.pad(b, ((0, 0), (0, dC), (0, 0))).astype(jnp.float32)
    return dict(w1s=w1s, ws=ws, w2=w2, b=b,
                n_in=C, n_in_padded=Cp, n_depth=D)


def _vmem_budget_bytes():
    """~75% of physical VMEM: ~48 MiB on v7x (64 MiB/TC), ~96 MiB on v5e/v6e."""
    phys = 64 * 1024 * 1024            # conservative default (v7x TensorCore)
    try:
        phys = int(pltpu.get_tpu_info().vmem_capacity_bytes)
    except Exception:
        pass
    return max(32 * 1024 * 1024, (3 * phys) // 4)


def resnet1d_forward(x, params, *, lane_tile_target=2048):
    """x: (B, C, T) float32.  params: stacked per-block conv weights."""
    B, C, T = x.shape
    pk = pack_params(params)
    Cp, D = pk["n_in_padded"], pk["n_depth"]

    # --- fold batch into the lane (time) axis --------------------------------
    Tp = _round_up(T, 128)
    elems_per_tile = max(1, min(B, lane_tile_target // Tp))
    if B >= 2:
        # keep >= 2 lane tiles so the "parallel" grid axis can feed both
        # TensorCores on a v7x megacore.
        elems_per_tile = min(elems_per_tile, -(-B // 2))

    budget = _vmem_budget_bytes()
    weight_bytes = ((pk["w1s"].size + pk["ws"].size + pk["w2"].size) * 2
                    + D * Cp * 128 * 4)         # biases pad to 128 lanes in VMEM

    def est_bytes(etile):
        act = Cp * etile * Tp * 4
        # 2 double-buffered activation streams (in/out) + single-buffered
        # weights + in-loop working set (y_all alone is 3 tiles) + headroom.
        return 4 * act + weight_bytes + 16 * act

    while elems_per_tile > 1 and est_bytes(elems_per_tile) > budget:
        elems_per_tile -= 1

    Bp = _round_up(B, elems_per_tile)
    lane_tile = elems_per_tile * Tp
    num_tiles = (Bp * Tp) // lane_tile

    xp = jnp.pad(x, ((0, Bp - B), (0, Cp - C), (0, Tp - T)))
    x_f = jnp.transpose(xp, (1, 0, 2)).reshape(Cp, Bp * Tp)

    vmem_limit = int(min(max(2 * est_bytes(elems_per_tile), 32 * 1024 * 1024),
                         budget))

    kernel = functools.partial(_resnet1d_kernel, D, T, Tp)
    resident = dict(pipeline_mode=pl.Buffered(1))   # single-buffer the weights

    out_f = pl.pallas_call(
        kernel,
        out_shape=jax.ShapeDtypeStruct((Cp, Bp * Tp), jnp.float32),
        grid_spec=pltpu.PrefetchScalarGridSpec(
            num_scalar_prefetch=0,
            grid=(num_tiles,),
            in_specs=[
                pl.BlockSpec((Cp, lane_tile), lambda i: (0, i)),      # acts
                pl.BlockSpec(pk["w1s"].shape, lambda i: (0, 0, 0), **resident),
                pl.BlockSpec(pk["b"].shape, lambda i: (0, 0, 0), **resident),
                pl.BlockSpec(pk["ws"].shape, lambda i: (0, 0, 0), **resident),
                pl.BlockSpec(pk["w2"].shape, lambda i: (0, 0, 0), **resident),
            ],
            out_specs=pl.BlockSpec((Cp, lane_tile), lambda i: (0, i)),
        ),
        compiler_params=pltpu.CompilerParams(
            dimension_semantics=("parallel",),
            vmem_limit_bytes=vmem_limit),
    )(x_f, pk["w1s"], pk["b"], pk["ws"], pk["w2"])

    out = out_f.reshape(Cp, Bp, Tp).transpose(1, 0, 2)
    return out[:B, :C, :T]


def resnet1d_reference(x, params, matmul_dtype=jnp.float32):
    """Pure-JAX reference (lax.conv / einsum).

    matmul_dtype=bfloat16 mirrors the kernel's MXU operand quantization with
    f32 accumulation -> tight apples-to-apples check of the kernel logic.
    """
    n_depth = params["w1"].shape[0]
    md = matmul_dtype
    prec = lax.Precision.HIGHEST
    for d in range(n_depth):
        x_orig = x
        h = jnp.maximum(x, 0.0).astype(md)
        w1_oik = jnp.transpose(params["w1"][d], (1, 2, 0)).astype(md)  # (Co,Ci,3)
        y1 = lax.conv_general_dilated(
            h, w1_oik, window_strides=(1,), padding=((1, 1),),
            dimension_numbers=("NCH", "OIH", "NCH"),
            preferred_element_type=jnp.float32, precision=prec)
        y1 = y1 + params["b1"][d][None, :, None]
        skip = jnp.einsum("oi,bit->bot", params["ws"][d].astype(md),
                          y1.astype(md), preferred_element_type=jnp.float32,
                          precision=prec)
        skip = jnp.maximum(skip + params["bs"][d][None, :, None], 0.0)
        y2 = jnp.einsum("oi,bit->bot", params["w2"][d].astype(md),
                        skip.astype(md), preferred_element_type=jnp.float32,
                        precision=prec)
        x = y2 + params["b2"][d][None, :, None] + x_orig
    return x


def init_params(key, n_in, n_depth):
    """Deterministic synthetic init mimicking kaiming_normal_ (relu) weights."""
    C = n_in
    keys = jax.random.split(key, 6)
    gain = float(np.sqrt(2.0))
    std_k3 = gain / float(np.sqrt(C * 3))     # conv1: fan_in = C_in * 3
    std_k1 = gain / float(np.sqrt(C))         # 1x1 convs: fan_in = C_in
    bound_k3 = 1.0 / float(np.sqrt(C * 3))    # default conv bias init bound
    bound_k1 = 1.0 / float(np.sqrt(C))
    w1 = std_k3 * jax.random.normal(keys[0], (n_depth, 3, C, C), jnp.float32)
    ws = std_k1 * jax.random.normal(keys[1], (n_depth, C, C), jnp.float32)
    w2 = std_k1 * jax.random.normal(keys[2], (n_depth, C, C), jnp.float32)
    b1 = jax.random.uniform(keys[3], (n_depth, C), jnp.float32, -bound_k3, bound_k3)
    bs = jax.random.uniform(keys[4], (n_depth, C), jnp.float32, -bound_k1, bound_k1)
    b2 = jax.random.uniform(keys[5], (n_depth, C), jnp.float32, -bound_k1, bound_k1)
    return dict(w1=w1, b1=b1, ws=ws, bs=bs, w2=w2, b2=b2)


if __name__ == "__main__":
    # Small shapes chosen to exercise all padding paths: batch padding (3 -> 4
    # to get 2 even lane tiles), channel padding (20 -> 24) and time padding
    # (100 -> 128, exercising the extended right-edge mask).
    B, C, T = 3, 20, 100
    n_depth = 3
    key = jax.random.PRNGKey(0)
    kx, kp = jax.random.split(key)
    x = jax.random.normal(kx, (B, C, T), dtype=jnp.float32)
    params = init_params(kp, C, n_depth)

    out = jax.block_until_ready(resnet1d_forward(x, params))
    assert out.shape == (B, C, T) and out.dtype == jnp.float32

    # Tight check vs. a reference that uses the same bf16 MXU operands /
    # f32 accumulation: catches shift, mask, bias, residual or folding bugs.
    ref_bf16 = jax.block_until_ready(
        resnet1d_reference(x, params, matmul_dtype=jnp.bfloat16))
    np.testing.assert_allclose(np.asarray(out), np.asarray(ref_bf16),
                               rtol=1e-2, atol=1e-2)

    # Loose check vs. the full-f32 reference: bounds the (intentional) bf16
    # quantization error of the kernel.
    ref_f32 = jax.block_until_ready(resnet1d_reference(x, params))
    err = float(np.linalg.norm(np.asarray(out) - np.asarray(ref_f32)))
    scale = float(np.linalg.norm(np.asarray(ref_f32)))
    assert err <= 0.05 * scale, (err, scale)

    print("KERNEL_OK")
</pallas_src>

<mosaic_0001>
module attributes {stable_mosaic.version = 11 : i64} {
  func.func @_resnet1d_kernel(%arg0: i32, %arg1: memref<24x256xf32, #tpu.memory_space<vmem>>, %arg2: memref<3x72x24xbf16, #tpu.memory_space<vmem>>, %arg3: memref<3x24x3xf32, #tpu.memory_space<vmem>>, %arg4: memref<3x24x24xbf16, #tpu.memory_space<vmem>>, %arg5: memref<3x24x24xbf16, #tpu.memory_space<vmem>>, %arg6: memref<24x256xf32, #tpu.memory_space<vmem>>) attributes {dimension_semantics = [#tpu.dimension_semantics<parallel>], iteration_bounds = array<i64: 2>, scalar_prefetch = 0 : i64, scratch_operands = 0 : i64, tpu.core_type = #tpu.core_type<tc>, window_params = [{transform_indices = @transform_0, window_bounds = array<i64: 24, 256>}, {pipeline_mode = #tpu.pipeline_mode<synchronous>, transform_indices = @transform_1, window_bounds = array<i64: 3, 72, 24>}, {pipeline_mode = #tpu.pipeline_mode<synchronous>, transform_indices = @transform_2, window_bounds = array<i64: 3, 24, 3>}, {pipeline_mode = #tpu.pipeline_mode<synchronous>, transform_indices = @transform_3, window_bounds = array<i64: 3, 24, 24>}, {pipeline_mode = #tpu.pipeline_mode<synchronous>, transform_indices = @transform_4, window_bounds = array<i64: 3, 24, 24>}, {transform_indices = @transform_5, window_bounds = array<i64: 24, 256>}]} {
    %0 = tpu.iota {dimensions = array<i32: 1>} : vector<1x256xi32>
    %c128_i32 = arith.constant 128 : i32
    %c0_i32 = arith.constant 0 : i32
    %1 = arith.cmpi eq, %c128_i32, %c0_i32 : i32
    %c1_i32 = arith.constant 1 : i32
    %2 = arith.select %1, %c1_i32, %c128_i32 : i32
    %3 = vector.broadcast %2 : i32 to vector<1x256xi32>
    %4 = arith.remsi %0, %3 : vector<1x256xi32>
    %c0_i32_0 = arith.constant 0 : i32
    %5 = vector.broadcast %c0_i32_0 : i32 to vector<1x256xi32>
    %6 = arith.cmpi ne, %4, %5 : vector<1x256xi32>
    %c0_i32_1 = arith.constant 0 : i32
    %7 = vector.broadcast %c0_i32_1 : i32 to vector<1x256xi32>
    %8 = arith.cmpi slt, %4, %7 : vector<1x256xi32>
    %c0_i32_2 = arith.constant 0 : i32
    %9 = arith.cmpi slt, %2, %c0_i32_2 : i32
    %10 = vector.broadcast %9 : i1 to vector<1x256xi1>
    %11 = vector.broadcast %10 : vector<1x256xi1> to vector<1x256xi1>
    %12 = arith.xori %8, %11 : vector<1x256xi1>
    %13 = arith.andi %12, %6 : vector<1x256xi1>
    %14 = vector.broadcast %2 : i32 to vector<1x256xi32>
    %15 = arith.addi %4, %14 : vector<1x256xi32>
    %16 = arith.select %13, %15, %4 : vector<1x256xi1>, vector<1x256xi32>
    %c0_i32_3 = arith.constant 0 : i32
    %17 = vector.broadcast %c0_i32_3 : i32 to vector<1x256xi32>
    %18 = arith.cmpi eq, %16, %17 : vector<1x256xi32>
    %c127_i32 = arith.constant 127 : i32
    %19 = vector.broadcast %c127_i32 : i32 to vector<1x256xi32>
    %20 = arith.cmpi eq, %16, %19 : vector<1x256xi32>
    %c99_i32 = arith.constant 99 : i32
    %21 = vector.broadcast %c99_i32 : i32 to vector<1x256xi32>
    %22 = arith.cmpi eq, %16, %21 : vector<1x256xi32>
    %23 = arith.ori %20, %22 : vector<1x256xi1>
    %c0 = arith.constant 0 : index
    %c0_4 = arith.constant 0 : index
    %24 = vector.load %arg1[%c0, %c0_4] : memref<24x256xf32, #tpu.memory_space<vmem>>, vector<24x256xf32>
    %c0_i32_5 = arith.constant 0 : i32
    %cst = arith.constant 0.000000e+00 : f32
    %25 = vector.broadcast %cst : f32 to vector<24x256xf32>
    %26 = arith.maximumf %24, %25 : vector<24x256xf32>
    %27 = arith.truncf %26 : vector<24x256xf32> to vector<24x256xbf16>
    %28 = arith.index_cast %c0_i32_5 : i32 to index
    %c0_6 = arith.constant 0 : index
    %c0_7 = arith.constant 0 : index
    %29 = vector.load %arg3[%28, %c0_6, %c0_7] : memref<3x24x3xf32, #tpu.memory_space<vmem>>, vector<1x24x3xf32>
    %30 = vector.shape_cast %29 : vector<1x24x3xf32> to vector<24x3xf32>
    %31 = arith.index_cast %c0_i32_5 : i32 to index
    %c0_8 = arith.constant 0 : index
    %c0_9 = arith.constant 0 : index
    %32 = vector.load %arg2[%31, %c0_8, %c0_9] : memref<3x72x24xbf16, #tpu.memory_space<vmem>>, vector<1x72x24xbf16>
    %33 = vector.shape_cast %32 : vector<1x72x24xbf16> to vector<72x24xbf16>
    %cst_10 = arith.constant dense<0.000000e+00> : vector<72x256xf32>
    %34 = tpu.matmul %33, %27, %cst_10 {dimension_numbers = #tpu.dot_dimension_numbers<[1], [0], [0], [1], [0, 0, 1, 1], [], []>} : vector<72x24xbf16>, vector<24x256xbf16>, vector<72x256xf32> -> vector<72x256xf32>
    %35 = vector.extract_strided_slice %34 {offsets = [0, 0], sizes = [24, 256], strides = [1, 1]} : vector<72x256xf32> to vector<24x256xf32>
    %36 = vector.extract_strided_slice %34 {offsets = [24, 0], sizes = [24, 256], strides = [1, 1]} : vector<72x256xf32> to vector<24x256xf32>
    %37 = vector.extract_strided_slice %34 {offsets = [48, 0], sizes = [24, 256], strides = [1, 1]} : vector<72x256xf32> to vector<24x256xf32>
    %c1_i32_11 = arith.constant 1 : i32
    %38 = tpu.dynamic_rotate %35 by %c1_i32_11 dim 1 : vector<24x256xf32>, i32 -> vector<24x256xf32>
    %cst_12 = arith.constant 0.000000e+00 : f32
    %39 = vector.shape_cast %18 : vector<1x256xi1> to vector<1x256xi1>
    %40 = vector.broadcast %39 : vector<1x256xi1> to vector<24x256xi1>
    %41 = vector.broadcast %cst_12 : f32 to vector<24x256xf32>
    %42 = arith.select %40, %41, %38 : vector<24x256xi1>, vector<24x256xf32>
    %c255_i32 = arith.constant 255 : i32
    %43 = tpu.dynamic_rotate %37 by %c255_i32 dim 1 : vector<24x256xf32>, i32 -> vector<24x256xf32>
    %cst_13 = arith.constant 0.000000e+00 : f32
    %44 = vector.shape_cast %23 : vector<1x256xi1> to vector<1x256xi1>
    %45 = vector.broadcast %44 : vector<1x256xi1> to vector<24x256xi1>
    %46 = vector.broadcast %cst_13 : f32 to vector<24x256xf32>
    %47 = arith.select %45, %46, %43 : vector<24x256xi1>, vector<24x256xf32>
    %48 = arith.addf %42, %36 : vector<24x256xf32>
    %49 = arith.addf %48, %47 : vector<24x256xf32>
    %50 = vector.extract_strided_slice %30 {offsets = [0, 0], sizes = [24, 1], strides = [1, 1]} : vector<24x3xf32> to vector<24x1xf32>
    %51 = vector.broadcast %50 : vector<24x1xf32> to vector<24x256xf32>
    %52 = arith.addf %49, %51 : vector<24x256xf32>
    %53 = arith.index_cast %c0_i32_5 : i32 to index
    %c0_14 = arith.constant 0 : index
    %c0_15 = arith.constant 0 : index
    %54 = vector.load %arg4[%53, %c0_14, %c0_15] : memref<3x24x24xbf16, #tpu.memory_space<vmem>>, vector<1x24x24xbf16>
    %55 = vector.shape_cast %54 : vector<1x24x24xbf16> to vector<24x24xbf16>
    %56 = arith.truncf %52 : vector<24x256xf32> to vector<24x256xbf16>
    %cst_16 = arith.constant dense<0.000000e+00> : vector<24x256xf32>
    %57 = tpu.matmul %55, %56, %cst_16 {dimension_numbers = #tpu.dot_dimension_numbers<[1], [0], [0], [1], [0, 0, 1, 1], [], []>} : vector<24x24xbf16>, vector<24x256xbf16>, vector<24x256xf32> -> vector<24x256xf32>
    %58 = vector.extract_strided_slice %30 {offsets = [0, 1], sizes = [24, 1], strides = [1, 1]} : vector<24x3xf32> to vector<24x1xf32>
    %59 = vector.broadcast %58 : vector<24x1xf32> to vector<24x256xf32>
    %60 = arith.addf %57, %59 : vector<24x256xf32>
    %cst_17 = arith.constant 0.000000e+00 : f32
    %61 = vector.broadcast %cst_17 : f32 to vector<24x256xf32>
    %62 = arith.maximumf %60, %61 : vector<24x256xf32>
    %63 = arith.index_cast %c0_i32_5 : i32 to index
    %c0_18 = arith.constant 0 : index
    %c0_19 = arith.constant 0 : index
    %64 = vector.load %arg5[%63, %c0_18, %c0_19] : memref<3x24x24xbf16, #tpu.memory_space<vmem>>, vector<1x24x24xbf16>
    %65 = vector.shape_cast %64 : vector<1x24x24xbf16> to vector<24x24xbf16>
    %66 = arith.truncf %62 : vector<24x256xf32> to vector<24x256xbf16>
    %cst_20 = arith.constant dense<0.000000e+00> : vector<24x256xf32>
    %67 = tpu.matmul %65, %66, %cst_20 {dimension_numbers = #tpu.dot_dimension_numbers<[1], [0], [0], [1], [0, 0, 1, 1], [], []>} : vector<24x24xbf16>, vector<24x256xbf16>, vector<24x256xf32> -> vector<24x256xf32>
    %68 = vector.extract_strided_slice %30 {offsets = [0, 2], sizes = [24, 1], strides = [1, 1]} : vector<24x3xf32> to vector<24x1xf32>
    %69 = vector.broadcast %68 : vector<24x1xf32> to vector<24x256xf32>
    %70 = arith.addf %67, %69 : vector<24x256xf32>
    %71 = arith.addf %70, %24 : vector<24x256xf32>
    %c1_i32_21 = arith.constant 1 : i32
    %cst_22 = arith.constant 0.000000e+00 : f32
    %72 = vector.broadcast %cst_22 : f32 to vector<24x256xf32>
    %73 = arith.maximumf %71, %72 : vector<24x256xf32>
    %74 = arith.truncf %73 : vector<24x256xf32> to vector<24x256xbf16>
    %75 = arith.index_cast %c1_i32_21 : i32 to index
    %c0_23 = arith.constant 0 : index
    %c0_24 = arith.constant 0 : index
    %76 = vector.load %arg3[%75, %c0_23, %c0_24] : memref<3x24x3xf32, #tpu.memory_space<vmem>>, vector<1x24x3xf32>
    %77 = vector.shape_cast %76 : vector<1x24x3xf32> to vector<24x3xf32>
    %78 = arith.index_cast %c1_i32_21 : i32 to index
    %c0_25 = arith.constant 0 : index
    %c0_26 = arith.constant 0 : index
    %79 = vector.load %arg2[%78, %c0_25, %c0_26] : memref<3x72x24xbf16, #tpu.memory_space<vmem>>, vector<1x72x24xbf16>
    %80 = vector.shape_cast %79 : vector<1x72x24xbf16> to vector<72x24xbf16>
    %cst_27 = arith.constant dense<0.000000e+00> : vector<72x256xf32>
    %81 = tpu.matmul %80, %74, %cst_27 {dimension_numbers = #tpu.dot_dimension_numbers<[1], [0], [0], [1], [0, 0, 1, 1], [], []>} : vector<72x24xbf16>, vector<24x256xbf16>, vector<72x256xf32> -> vector<72x256xf32>
    %82 = vector.extract_strided_slice %81 {offsets = [0, 0], sizes = [24, 256], strides = [1, 1]} : vector<72x256xf32> to vector<24x256xf32>
    %83 = vector.extract_strided_slice %81 {offsets = [24, 0], sizes = [24, 256], strides = [1, 1]} : vector<72x256xf32> to vector<24x256xf32>
    %84 = vector.extract_strided_slice %81 {offsets = [48, 0], sizes = [24, 256], strides = [1, 1]} : vector<72x256xf32> to vector<24x256xf32>
    %c1_i32_28 = arith.constant 1 : i32
    %85 = tpu.dynamic_rotate %82 by %c1_i32_28 dim 1 : vector<24x256xf32>, i32 -> vector<24x256xf32>
    %cst_29 = arith.constant 0.000000e+00 : f32
    %86 = vector.shape_cast %18 : vector<1x256xi1> to vector<1x256xi1>
    %87 = vector.broadcast %86 : vector<1x256xi1> to vector<24x256xi1>
    %88 = vector.broadcast %cst_29 : f32 to vector<24x256xf32>
    %89 = arith.select %87, %88, %85 : vector<24x256xi1>, vector<24x256xf32>
    %c255_i32_30 = arith.constant 255 : i32
    %90 = tpu.dynamic_rotate %84 by %c255_i32_30 dim 1 : vector<24x256xf32>, i32 -> vector<24x256xf32>
    %cst_31 = arith.constant 0.000000e+00 : f32
    %91 = vector.shape_cast %23 : vector<1x256xi1> to vector<1x256xi1>
    %92 = vector.broadcast %91 : vector<1x256xi1> to vector<24x256xi1>
    %93 = vector.broadcast %cst_31 : f32 to vector<24x256xf32>
    %94 = arith.select %92, %93, %90 : vector<24x256xi1>, vector<24x256xf32>
    %95 = arith.addf %89, %83 : vector<24x256xf32>
    %96 = arith.addf %95, %94 : vector<24x256xf32>
    %97 = vector.extract_strided_slice %77 {offsets = [0, 0], sizes = [24, 1], strides = [1, 1]} : vector<24x3xf32> to vector<24x1xf32>
    %98 = vector.broadcast %97 : vector<24x1xf32> to vector<24x256xf32>
    %99 = arith.addf %96, %98 : vector<24x256xf32>
    %100 = arith.index_cast %c1_i32_21 : i32 to index
    %c0_32 = arith.constant 0 : index
    %c0_33 = arith.constant 0 : index
    %101 = vector.load %arg4[%100, %c0_32, %c0_33] : memref<3x24x24xbf16, #tpu.memory_space<vmem>>, vector<1x24x24xbf16>
    %102 = vector.shape_cast %101 : vector<1x24x24xbf16> to vector<24x24xbf16>
    %103 = arith.truncf %99 : vector<24x256xf32> to vector<24x256xbf16>
    %cst_34 = arith.constant dense<0.000000e+00> : vector<24x256xf32>
    %104 = tpu.matmul %102, %103, %cst_34 {dimension_numbers = #tpu.dot_dimension_numbers<[1], [0], [0], [1], [0, 0, 1, 1], [], []>} : vector<24x24xbf16>, vector<24x256xbf16>, vector<24x256xf32> -> vector<24x256xf32>
    %105 = vector.extract_strided_slice %77 {offsets = [0, 1], sizes = [24, 1], strides = [1, 1]} : vector<24x3xf32> to vector<24x1xf32>
    %106 = vector.broadcast %105 : vector<24x1xf32> to vector<24x256xf32>
    %107 = arith.addf %104, %106 : vector<24x256xf32>
    %cst_35 = arith.constant 0.000000e+00 : f32
    %108 = vector.broadcast %cst_35 : f32 to vector<24x256xf32>
    %109 = arith.maximumf %107, %108 : vector<24x256xf32>
    %110 = arith.index_cast %c1_i32_21 : i32 to index
    %c0_36 = arith.constant 0 : index
    %c0_37 = arith.constant 0 : index
    %111 = vector.load %arg5[%110, %c0_36, %c0_37] : memref<3x24x24xbf16, #tpu.memory_space<vmem>>, vector<1x24x24xbf16>
    %112 = vector.shape_cast %111 : vector<1x24x24xbf16> to vector<24x24xbf16>
    %113 = arith.truncf %109 : vector<24x256xf32> to vector<24x256xbf16>
    %cst_38 = arith.constant dense<0.000000e+00> : vector<24x256xf32>
    %114 = tpu.matmul %112, %113, %cst_38 {dimension_numbers = #tpu.dot_dimension_numbers<[1], [0], [0], [1], [0, 0, 1, 1], [], []>} : vector<24x24xbf16>, vector<24x256xbf16>, vector<24x256xf32> -> vector<24x256xf32>
    %115 = vector.extract_strided_slice %77 {offsets = [0, 2], sizes = [24, 1], strides = [1, 1]} : vector<24x3xf32> to vector<24x1xf32>
    %116 = vector.broadcast %115 : vector<24x1xf32> to vector<24x256xf32>
    %117 = arith.addf %114, %116 : vector<24x256xf32>
    %118 = arith.addf %117, %71 : vector<24x256xf32>
    %c2_i32 = arith.constant 2 : i32
    %cst_39 = arith.constant 0.000000e+00 : f32
    %119 = vector.broadcast %cst_39 : f32 to vector<24x256xf32>
    %120 = arith.maximumf %118, %119 : vector<24x256xf32>
    %121 = arith.truncf %120 : vector<24x256xf32> to vector<24x256xbf16>
    %122 = arith.index_cast %c2_i32 : i32 to index
    %c0_40 = arith.constant 0 : index
    %c0_41 = arith.constant 0 : index
    %123 = vector.load %arg3[%122, %c0_40, %c0_41] : memref<3x24x3xf32, #tpu.memory_space<vmem>>, vector<1x24x3xf32>
    %124 = vector.shape_cast %123 : vector<1x24x3xf32> to vector<24x3xf32>
    %125 = arith.index_cast %c2_i32 : i32 to index
    %c0_42 = arith.constant 0 : index
    %c0_43 = arith.constant 0 : index
    %126 = vector.load %arg2[%125, %c0_42, %c0_43] : memref<3x72x24xbf16, #tpu.memory_space<vmem>>, vector<1x72x24xbf16>
    %127 = vector.shape_cast %126 : vector<1x72x24xbf16> to vector<72x24xbf16>
    %cst_44 = arith.constant dense<0.000000e+00> : vector<72x256xf32>
    %128 = tpu.matmul %127, %121, %cst_44 {dimension_numbers = #tpu.dot_dimension_numbers<[1], [0], [0], [1], [0, 0, 1, 1], [], []>} : vector<72x24xbf16>, vector<24x256xbf16>, vector<72x256xf32> -> vector<72x256xf32>
    %129 = vector.extract_strided_slice %128 {offsets = [0, 0], sizes = [24, 256], strides = [1, 1]} : vector<72x256xf32> to vector<24x256xf32>
    %130 = vector.extract_strided_slice %128 {offsets = [24, 0], sizes = [24, 256], strides = [1, 1]} : vector<72x256xf32> to vector<24x256xf32>
    %131 = vector.extract_strided_slice %128 {offsets = [48, 0], sizes = [24, 256], strides = [1, 1]} : vector<72x256xf32> to vector<24x256xf32>
    %c1_i32_45 = arith.constant 1 : i32
    %132 = tpu.dynamic_rotate %129 by %c1_i32_45 dim 1 : vector<24x256xf32>, i32 -> vector<24x256xf32>
    %cst_46 = arith.constant 0.000000e+00 : f32
    %133 = vector.shape_cast %18 : vector<1x256xi1> to vector<1x256xi1>
    %134 = vector.broadcast %133 : vector<1x256xi1> to vector<24x256xi1>
    %135 = vector.broadcast %cst_46 : f32 to vector<24x256xf32>
    %136 = arith.select %134, %135, %132 : vector<24x256xi1>, vector<24x256xf32>
    %c255_i32_47 = arith.constant 255 : i32
    %137 = tpu.dynamic_rotate %131 by %c255_i32_47 dim 1 : vector<24x256xf32>, i32 -> vector<24x256xf32>
    %cst_48 = arith.constant 0.000000e+00 : f32
    %138 = vector.shape_cast %23 : vector<1x256xi1> to vector<1x256xi1>
    %139 = vector.broadcast %138 : vector<1x256xi1> to vector<24x256xi1>
    %140 = vector.broadcast %cst_48 : f32 to vector<24x256xf32>
    %141 = arith.select %139, %140, %137 : vector<24x256xi1>, vector<24x256xf32>
    %142 = arith.addf %136, %130 : vector<24x256xf32>
    %143 = arith.addf %142, %141 : vector<24x256xf32>
    %144 = vector.extract_strided_slice %124 {offsets = [0, 0], sizes = [24, 1], strides = [1, 1]} : vector<24x3xf32> to vector<24x1xf32>
    %145 = vector.broadcast %144 : vector<24x1xf32> to vector<24x256xf32>
    %146 = arith.addf %143, %145 : vector<24x256xf32>
    %147 = arith.index_cast %c2_i32 : i32 to index
    %c0_49 = arith.constant 0 : index
    %c0_50 = arith.constant 0 : index
    %148 = vector.load %arg4[%147, %c0_49, %c0_50] : memref<3x24x24xbf16, #tpu.memory_space<vmem>>, vector<1x24x24xbf16>
    %149 = vector.shape_cast %148 : vector<1x24x24xbf16> to vector<24x24xbf16>
    %150 = arith.truncf %146 : vector<24x256xf32> to vector<24x256xbf16>
    %cst_51 = arith.constant dense<0.000000e+00> : vector<24x256xf32>
    %151 = tpu.matmul %149, %150, %cst_51 {dimension_numbers = #tpu.dot_dimension_numbers<[1], [0], [0], [1], [0, 0, 1, 1], [], []>} : vector<24x24xbf16>, vector<24x256xbf16>, vector<24x256xf32> -> vector<24x256xf32>
    %152 = vector.extract_strided_slice %124 {offsets = [0, 1], sizes = [24, 1], strides = [1, 1]} : vector<24x3xf32> to vector<24x1xf32>
    %153 = vector.broadcast %152 : vector<24x1xf32> to vector<24x256xf32>
    %154 = arith.addf %151, %153 : vector<24x256xf32>
    %cst_52 = arith.constant 0.000000e+00 : f32
    %155 = vector.broadcast %cst_52 : f32 to vector<24x256xf32>
    %156 = arith.maximumf %154, %155 : vector<24x256xf32>
    %157 = arith.index_cast %c2_i32 : i32 to index
    %c0_53 = arith.constant 0 : index
    %c0_54 = arith.constant 0 : index
    %158 = vector.load %arg5[%157, %c0_53, %c0_54] : memref<3x24x24xbf16, #tpu.memory_space<vmem>>, vector<1x24x24xbf16>
    %159 = vector.shape_cast %158 : vector<1x24x24xbf16> to vector<24x24xbf16>
    %160 = arith.truncf %156 : vector<24x256xf32> to vector<24x256xbf16>
    %cst_55 = arith.constant dense<0.000000e+00> : vector<24x256xf32>
    %161 = tpu.matmul %159, %160, %cst_55 {dimension_numbers = #tpu.dot_dimension_numbers<[1], [0], [0], [1], [0, 0, 1, 1], [], []>} : vector<24x24xbf16>, vector<24x256xbf16>, vector<24x256xf32> -> vector<24x256xf32>
    %162 = vector.extract_strided_slice %124 {offsets = [0, 2], sizes = [24, 1], strides = [1, 1]} : vector<24x3xf32> to vector<24x1xf32>
    %163 = vector.broadcast %162 : vector<24x1xf32> to vector<24x256xf32>
    %164 = arith.addf %161, %163 : vector<24x256xf32>
    %165 = arith.addf %164, %118 : vector<24x256xf32>
    %c3_i32 = arith.constant 3 : i32
    %c0_56 = arith.constant 0 : index
    %c0_57 = arith.constant 0 : index
    %166 = vector.load %arg6[%c0_56, %c0_57] : memref<24x256xf32, #tpu.memory_space<vmem>>, vector<24x256xf32>
    tpu.vector_store %arg6[%c0_56, %c0_57], %165 {strides = array<i32>} : memref<24x256xf32, #tpu.memory_space<vmem>>, vector<24x256xf32>,
    return
  }
  func.func @transform_0(%arg0: i32) -> (i32, i32) {
    %c0_i32 = arith.constant 0 : i32
    %c0_i32_0 = arith.constant 0 : i32
    return %c0_i32, %arg0 : i32, i32
  }
  func.func @transform_1(%arg0: i32) -> (i32, i32, i32) {
    %c0_i32 = arith.constant 0 : i32
    %c0_i32_0 = arith.constant 0 : i32
    %c0_i32_1 = arith.constant 0 : i32
    %c0_i32_2 = arith.constant 0 : i32
    return %c0_i32, %c0_i32_0, %c0_i32_1 : i32, i32, i32
  }
  func.func @transform_2(%arg0: i32) -> (i32, i32, i32) {
    %c0_i32 = arith.constant 0 : i32
    %c0_i32_0 = arith.constant 0 : i32
    %c0_i32_1 = arith.constant 0 : i32
    %c0_i32_2 = arith.constant 0 : i32
    return %c0_i32, %c0_i32_0, %c0_i32_1 : i32, i32, i32
  }
  func.func @transform_3(%arg0: i32) -> (i32, i32, i32) {
    %c0_i32 = arith.constant 0 : i32
    %c0_i32_0 = arith.constant 0 : i32
    %c0_i32_1 = arith.constant 0 : i32
    %c0_i32_2 = arith.constant 0 : i32
    return %c0_i32, %c0_i32_0, %c0_i32_1 : i32, i32, i32
  }
  func.func @transform_4(%arg0: i32) -> (i32, i32, i32) {
    %c0_i32 = arith.constant 0 : i32
    %c0_i32_0 = arith.constant 0 : i32
    %c0_i32_1 = arith.constant 0 : i32
    %c0_i32_2 = arith.constant 0 : i32
    return %c0_i32, %c0_i32_0, %c0_i32_1 : i32, i32, i32
  }
  func.func @transform_5(%arg0: i32) -> (i32, i32) {
    %c0_i32 = arith.constant 0 : i32
    %c0_i32_0 = arith.constant 0 : i32
    return %c0_i32, %arg0 : i32, i32
  }
}

</mosaic_0001>

<llo_original>
// kernel: tpu_custom_call.1
$region0: #{tpu_custom_call.1}
  #allocation0 [shape = 'u32[]', space=smem, size = 0x4, offset = 0x4, fixed_abs, tag = 'smem constant byte address 0x4 - core index']
  #allocation1 [shape = 'u32[144,128]{1,0:T(1,128)}', space=vmem, size = 0x12000, scoped, tag = 'internal scratch']
  %s0 = inlined_call_operand.vmem [shape: f32[24,512], index: 0, kind: input, shape index: {}]
  %s1 = inlined_call_operand.vmem [shape: bf16[3,72,24], index: 1, kind: input, shape index: {}]
  %s2 = inlined_call_operand.vmem [shape: f32[3,24,3], index: 2, kind: input, shape index: {}]
  %s3 = inlined_call_operand.vmem [shape: bf16[3,24,24], index: 3, kind: input, shape index: {}]
  %s4 = inlined_call_operand.vmem [shape: bf16[3,24,24], index: 4, kind: input, shape index: {}]
  %s5 = inlined_call_operand.hbm [shape: f32[24,512], index: 5, kind: output, shape index: {}]
  %s6 = sld [smem:[#allocation0]]
  $region76: #{tpu_custom_call.1} parent=0
    _
  %s8 = ssub.s32 1, %s6
  %s9 = scalar_select 0, %s8, %s6
  $region1: #{tpu_custom_call.1} parent=0
    #allocation2 [shape = 'u8[49152]{0}', space=vmem, size = 0xc000, scoped, tag = 'input window, operand 0']
    #allocation3 [shape = 'u8[49152]{0}', space=vmem, size = 0xc000, scoped, tag = 'output window, operand 0']
    #allocation4 [shape = 's32[2]{0}', space=sflag, size = 0x8, scoped, tag = 'scoped memory for tpu_custom_call.1']
    %10 = vsyncpa [#allocation4], 0
    %s11 = scalar_lea.sflag [#allocation4], 1
    %12 = vsyncpa %s11, 0
    loop: start=0, step=1, limit=4
    $region2: #{tpu_custom_call.1} parent=1 // loop_pre_header
      _
    $region3: #{tpu_custom_call.1} parent=1 // loop_header
      %s14 = sphi 0, %s18
      %p15 = scmp.ge.s32.totalorder %s14, 4
      %s24 = sphi 0, %s26
      %s27 = sphi 0, %s24
      %s28 = sphi 0, %s27
      %s44 = sphi 0, %s28
      %s48 = sphi 0, %s48
      %s50 = sphi 0, %s48
      %s51 = sphi 0, %s50
      %s65 = sphi 0, %s51
      %s69 = sphi 0, %s69
      %s71 = sphi 0, %s69
      %s72 = sphi 0, %s71
      %s86 = sphi 0, %s72
      %s90 = sphi 0, %s90
      %s92 = sphi 0, %s90
      %s93 = sphi 0, %s92
      %s107 = sphi 0, %s93
      %s111 = sphi 0, %s111
      %s113 = sphi 0, %s111
      %s114 = sphi 0, %s113
      %s128 = sphi 0, %s114
      %s134 = sphi 0, %s136
      %s137 = sphi 0, %s134
      %s138 = sphi 0, %s137
      %s154 = sphi 0, %s138
    $region4: #{tpu_custom_call.1} parent=1 // loop_header_branch
      %17 = sbr.rel (%p15) target = $region8
    $region5: #{tpu_custom_call.1} parent=1 // loop_body
      %s19 = ssub.s32 %s14, 1
      %s20 = ssub.s32 %s14, 2
      %s21 = sadd.s32 %s14, 1
      %s22 = ssub.s32 %s14, %s21
      %p23 = scmp.eq.s32.totalorder %s22, 0
      %s25 = sadd.s32 %s24, 1
      %s26 = scalar_select %p23, %s24, %s25
      %p29 = pneg %p23
      %p30 = scmp.eq.s32.totalorder %s14, 1
      %p31 = por %p29, %p30
      %p32 = scmp.ne.s32.totalorder %s24, %s27
      %p33 = scmp.eq.s32.totalorder %s14, 0
      %p34 = por %p32, %p33
      %p35 = scmp.ne.s32.totalorder %s24, %s27
      %p36 = scmp.eq.s32.totalorder %s19, 1
      %p37 = por %p35, %p36
      %p38 = scmp.ne.s32.totalorder %s27, %s28
      %p39 = scmp.eq.s32.totalorder %s19, 0
      %p40 = por %p38, %p39
      %p41 = scmp.ne.s32.totalorder %s27, %s28
      %p42 = scmp.eq.s32.totalorder %s20, 1
      %p43 = por %p41, %p42
      %p45 = scmp.ne.s32.totalorder %s28, %s44
      %p46 = scmp.eq.s32.totalorder %s20, 0
      %p47 = por %p45, %p46
      %s49 = sadd.s32 %s48, 1
      %p52 = scmp.eq.s32.totalorder %s14, 1
      %p53 = scmp.ne.s32.totalorder %s48, %s50
      %p54 = scmp.eq.s32.totalorder %s14, 0
      %p55 = por %p53, %p54
      %p56 = scmp.ne.s32.totalorder %s48, %s50
      %p57 = scmp.eq.s32.totalorder %s19, 1
      %p58 = por %p56, %p57
      %p59 = scmp.ne.s32.totalorder %s50, %s51
      %p60 = scmp.eq.s32.totalorder %s19, 0
      %p61 = por %p59, %p60
      %p62 = scmp.ne.s32.totalorder %s50, %s51
      %p63 = scmp.eq.s32.totalorder %s20, 1
      %p64 = por %p62, %p63
      %p66 = scmp.ne.s32.totalorder %s51, %s65
      %p67 = scmp.eq.s32.totalorder %s20, 0
      %p68 = por %p66, %p67
      %s70 = sadd.s32 %s69, 1
      %p73 = scmp.eq.s32.totalorder %s14, 1
      %p74 = scmp.ne.s32.totalorder %s69, %s71
      %p75 = scmp.eq.s32.totalorder %s14, 0
      %p76 = por %p74, %p75
      %p77 = scmp.ne.s32.totalorder %s69, %s71
      %p78 = scmp.eq.s32.totalorder %s19, 1
      %p79 = por %p77, %p78
      %p80 = scmp.ne.s32.totalorder %s71, %s72
      %p81 = scmp.eq.s32.totalorder %s19, 0
      %p82 = por %p80, %p81
      %p83 = scmp.ne.s32.totalorder %s71, %s72
      %p84 = scmp.eq.s32.totalorder %s20, 1
      %p85 = por %p83, %p84
      %p87 = scmp.ne.s32.totalorder %s72, %s86
      %p88 = scmp.eq.s32.totalorder %s20, 0
      %p89 = por %p87, %p88
      %s91 = sadd.s32 %s90, 1
      %p94 = scmp.eq.s32.totalorder %s14, 1
      %p95 = scmp.ne.s32.totalorder %s90, %s92
      %p96 = scmp.eq.s32.totalorder %s14, 0
      %p97 = por %p95, %p96
      %p98 = scmp.ne.s32.totalorder %s90, %s92
      %p99 = scmp.eq.s32.totalorder %s19, 1
      %p100 = por %p98, %p99
      %p101 = scmp.ne.s32.totalorder %s92, %s93
      %p102 = scmp.eq.s32.totalorder %s19, 0
      %p103 = por %p101, %p102
      %p104 = scmp.ne.s32.totalorder %s92, %s93
      %p105 = scmp.eq.s32.totalorder %s20, 1
      %p106 = por %p104, %p105
      %p108 = scmp.ne.s32.totalorder %s93, %s107
      %p109 = scmp.eq.s32.totalorder %s20, 0
      %p110 = por %p108, %p109
      %s112 = sadd.s32 %s111, 1
      %p115 = scmp.eq.s32.totalorder %s14, 1
      %p116 = scmp.ne.s32.totalorder %s111, %s113
      %p117 = scmp.eq.s32.totalorder %s14, 0
      %p118 = por %p116, %p117
      %p119 = scmp.ne.s32.totalorder %s111, %s113
      %p120 = scmp.eq.s32.totalorder %s19, 1
      %p121 = por %p119, %p120
      %p122 = scmp.ne.s32.totalorder %s113, %s114
      %p123 = scmp.eq.s32.totalorder %s19, 0
      %p124 = por %p122, %p123
      %p125 = scmp.ne.s32.totalorder %s113, %s114
      %p126 = scmp.eq.s32.totalorder %s20, 1
      %p127 = por %p125, %p126
      %p129 = scmp.ne.s32.totalorder %s114, %s128
      %p130 = scmp.eq.s32.totalorder %s20, 0
      %p131 = por %p129, %p130
      %s132 = ssub.s32 %s14, %s21
      %p133 = scmp.eq.s32.totalorder %s132, 0
      %s135 = sadd.s32 %s134, 1
      %s136 = scalar_select %p133, %s134, %s135
      %p139 = pneg %p133
      %p140 = scmp.eq.s32.totalorder %s14, 1
      %p141 = por %p139, %p140
      %p142 = scmp.ne.s32.totalorder %s134, %s137
      %p143 = scmp.eq.s32.totalorder %s14, 0
      %p144 = por %p142, %p143
      %p145 = scmp.ne.s32.totalorder %s134, %s137
      %p146 = scmp.eq.s32.totalorder %s19, 1
      %p147 = por %p145, %p146
      %p148 = scmp.ne.s32.totalorder %s137, %s138
      %p149 = scmp.eq.s32.totalorder %s19, 0
      %p150 = por %p148, %p149
      %p151 = scmp.ne.s32.totalorder %s137, %s138
      %p152 = scmp.eq.s32.totalorder %s20, 1
      %p153 = por %p151, %p152
      %p155 = scmp.ne.s32.totalorder %s138, %s154
      %p156 = scmp.eq.s32.totalorder %s20, 0
      %p157 = por %p155, %p156
      %p158 = scmp.le.s32.totalorder 1, %s14
      %p159 = scmp.lt.s32.totalorder %s14, 3
      %p160 = pnand %p158, %p159
      %p161 = pneg %p160
      // Predicated region
      $region9: #{tpu_custom_call.1} parent=5 // pred_check
        _
      $region10: #{tpu_custom_call.1} parent=5 // pred_check_branch
        %163 = sbr.rel (%p160) target = $region12
      $region11: #{tpu_custom_call.1} parent=5 // pred_region
        %s164 = ssub.s32 %s14, 1
        // Predicated region
        $region13: #{tpu_custom_call.1} parent=11 // pred_check
          %p165 = pneg %p61
        $region14: #{tpu_custom_call.1} parent=11 // pred_check_branch
          %167 = sbr.rel (%p165) target = $region16
        $region15: #{tpu_custom_call.1} parent=11 // pred_region
          _
        $region16: #{tpu_custom_call.1} parent=11 // pred_fallthru
          _
        // Predicated region
        $region17: #{tpu_custom_call.1} parent=11 // pred_check
          %p168 = pneg %p82
        $region18: #{tpu_custom_call.1} parent=11 // pred_check_branch
          %170 = sbr.rel (%p168) target = $region20
        $region19: #{tpu_custom_call.1} parent=11 // pred_region
          _
        $region20: #{tpu_custom_call.1} parent=11 // pred_fallthru
          _
        // Predicated region
        $region21: #{tpu_custom_call.1} parent=11 // pred_check
          %p171 = pneg %p103
        $region22: #{tpu_custom_call.1} parent=11 // pred_check_branch
          %173 = sbr.rel (%p171) target = $region24
        $region23: #{tpu_custom_call.1} parent=11 // pred_region
          _
        $region24: #{tpu_custom_call.1} parent=11 // pred_fallthru
          _
        // Predicated region
        $region25: #{tpu_custom_call.1} parent=11 // pred_check
          %p174 = pneg %p124
        $region26: #{tpu_custom_call.1} parent=11 // pred_check_branch
          %176 = sbr.rel (%p174) target = $region28
        $region27: #{tpu_custom_call.1} parent=11 // pred_region
          _
        $region28: #{tpu_custom_call.1} parent=11 // pred_fallthru
          _
      $region12: #{tpu_custom_call.1} parent=5 // pred_fallthru
        _
      %p177 = scmp.lt.s32.totalorder %s14, 2
      // Predicated region
      $region29: #{tpu_custom_call.1} parent=5 // pred_check
        %p178 = pneg %p177
      $region30: #{tpu_custom_call.1} parent=5 // pred_check_branch
        %180 = sbr.rel (%p178) target = $region32
      $region31: #{tpu_custom_call.1} parent=5 // pred_region
        // Predicated region
        $region33: #{tpu_custom_call.1} parent=31 // pred_check
          %p181 = pneg %p34
        $region34: #{tpu_custom_call.1} parent=31 // pred_check_branch
          %183 = sbr.rel (%p181) target = $region36
        $region35: #{tpu_custom_call.1} parent=31 // pred_region
          %s184 = sand.u32 %s24, 1
          %s185 = sand.u32 %s24, 1
          %s186 = smul.addr %s185, 48
          %s187 = scalar_lea.vmem [#allocation2], %s186
          %s188 = smul.u32 2, %s14
          %s189 = smul.addr %s188, 8
          %s190 = scalar_lea.vmem %s0, %s189
          // Predicated region
          $region37: #{tpu_custom_call.1} parent=35 // pred_check
            _
          $region38: #{tpu_custom_call.1} parent=35 // pred_check_branch
            %192 = sbr.rel (0) target = $region40
          $region39: #{tpu_custom_call.1} parent=35 // pred_region
            // Predicated region
            $region41: #{tpu_custom_call.1} parent=39 // pred_check
              _
            $region42: #{tpu_custom_call.1} parent=39 // pred_check_branch
              %194 = sbr.rel (0) target = $region44
            $region43: #{tpu_custom_call.1} parent=39 // pred_region
              loop: start=0, step=1, limit=1
              $region45: #{tpu_custom_call.1} parent=43 // loop_pre_header
                _
              $region46: #{tpu_custom_call.1} parent=43 // loop_header
                %s196 = sphi 0, %s200
                %p197 = scmp.ge.s32.totalorder %s196, 1
                %s201 = sphi %s190, %s190
                %s202 = sphi %s187, %s187
              $region47: #{tpu_custom_call.1} parent=43 // loop_header_branch
                %199 = sbr.rel (%p197) target = $region51
              $region48: #{tpu_custom_call.1} parent=43 // loop_body
                %v203 = vld [vmem:[%s201] sm:$0xff]
                %204 = vst [vmem:[%s202] sm:$0xff] %v203
                %v205 = vld [vmem:[%s201 + $0x8] sm:$0xff]
                %206 = vst [vmem:[%s202 + $0x8] sm:$0xff] %v205
                %v207 = vld [vmem:[%s201 + $0x20] sm:$0xff]
                %208 = vst [vmem:[%s202 + $0x10] sm:$0xff] %v207
                %v209 = vld [vmem:[%s201 + $0x28] sm:$0xff]
                %210 = vst [vmem:[%s202 + $0x18] sm:$0xff] %v209
                %v211 = vld [vmem:[%s201 + $0x40] sm:$0xff]
                %212 = vst [vmem:[%s202 + $0x20] sm:$0xff] %v211
                %v213 = vld [vmem:[%s201 + $0x48] sm:$0xff]
                %214 = vst [vmem:[%s202 + $0x28] sm:$0xff] %v213
              $region49: #{tpu_custom_call.1} parent=43 // loop_footer
                %s200 = sadd.s32 1, %s196
              $region50: #{tpu_custom_call.1} parent=43 // loop_footer_branch
                %195 = sbr.rel target = $region46
              $region51: #{tpu_custom_call.1} parent=43 // loop_exit
                _
            $region44: #{tpu_custom_call.1} parent=39 // pred_fallthru
              _
            // Predicated region
            $region52: #{tpu_custom_call.1} parent=39 // pred_check
              _
            $region53: #{tpu_custom_call.1} parent=39 // pred_check_branch
              %216 = sbr.rel target = $region55
            $region54: #{tpu_custom_call.1} parent=39 // pred_region
              _
            $region55: #{tpu_custom_call.1} parent=39 // pred_fallthru
              _
          $region40: #{tpu_custom_call.1} parent=35 // pred_fallthru
            _
          %217 = vnop
        $region36: #{tpu_custom_call.1} parent=31 // pred_fallthru
          _
      $region32: #{tpu_custom_call.1} parent=5 // pred_fallthru
        _
      %p218 = scmp.le.s32.totalorder 1, %s14
      %p219 = scmp.lt.s32.totalorder %s14, 3
      %p220 = pnand %p218, %p219
      %p221 = pneg %p220
      // Predicated region
      $region56: #{tpu_custom_call.1} parent=5 // pred_check
        _
      $region57: #{tpu_custom_call.1} parent=5 // pred_check_branch
        %223 = sbr.rel (%p220) target = $region59
      $region58: #{tpu_custom_call.1} parent=5 // pred_region
        %s224 = ssub.s32 %s14, 1
        %s225 = sand.u32 %s27, 1
        %s226 = sand.u32 %s27, 1
        %s227 = smul.addr %s226, 48
        %s228 = scalar_lea.vmem [#allocation2], %s227
        // Predicated region
        $region60: #{tpu_custom_call.1} parent=58 // pred_check
          %p229 = pneg %p40
        $region61: #{tpu_custom_call.1} parent=58 // pred_check_branch
          %231 = sbr.rel (%p229) target = $region63
        $region62: #{tpu_custom_call.1} parent=58 // pred_region
          _
        $region63: #{tpu_custom_call.1} parent=58 // pred_fallthru
          _
        %s232 = sand.u32 %s27, 1
        %s233 = sand.u32 %s27, 1
        %s234 = smul.addr %s233, 48
        %s235 = scalar_lea.vmem [#allocation2], %s234
        %p236 = pneg %p40
        %p237 = pneg %p37
        %p238 = pneg %p61
        %p239 = pneg %p58
        %p240 = pneg %p82
        %p241 = pneg %p79
        %p242 = pneg %p103
        %p243 = pneg %p100
        %p244 = pneg %p124
        %p245 = pneg %p121
        %p246 = pneg %p150
        %p247 = pneg %p147
        %s248 = sand.u32 %s137, 1
        %s249 = scalar_lea.sflag [#allocation4], %s248
        %s250 = sand.u32 %s137, 1
        %s251 = smul.addr %s250, 48
        %s252 = scalar_lea.vmem [#allocation3], %s251
        %s253 = smul.u32 2, %s19
        %s254 = smul.u32 2, %s19
        %v256 = vlaneseq
        %v257 = vand.u32 %v256, 127
        %v258 = vadd.s32 %v257, 128
        %vm259 = vcmp.lt.s32.totalorder %v257, 0
        %v260 = vsub.s32 0, %v257
        %v261 = vsel %vm259, %v260, %v257
        %v262 = vshrl.u32 %v261, 7
        %v263 = vand.u32 %v261, 127
        %v264 = vsub.s32 0, %v263
        %v265 = vsel %vm259, %v264, %v263
        %vm266 = vcmp.lt.s32.totalorder %v258, 0
        %v267 = vsub.s32 0, %v258
        %v268 = vsel %vm266, %v267, %v258
        %v269 = vshrl.u32 %v268, 7
        %v270 = vand.u32 %v268, 127
        %v271 = vsub.s32 0, %v270
        %v272 = vsel %vm266, %v271, %v270
        %vm273 = vcmp.ne.s32.totalorder %v265, 0
        %vm274 = vcmp.ne.s32.totalorder %v272, 0
        %vm275 = vcmp.lt.s32.totalorder %v265, 0
        %vm276 = vcmp.lt.s32.totalorder %v272, 0
        %vm277 = vmand %vm275, %vm273
        %vm278 = vmand %vm276, %vm274
        %v279 = vadd.s32 %v265, 128
        %v280 = vadd.s32 %v272, 128
        %v281 = vsel %vm277, %v279, %v265
        %v282 = vsel %vm278, %v280, %v272
        %vm283 = vcmp.eq.s32.totalorder %v281, 0
        %vm284 = vcmp.eq.s32.totalorder %v282, 0
        %vm285 = vcmp.eq.s32.totalorder %v281, 127
        %vm286 = vcmp.eq.s32.totalorder %v282, 127
        %vm287 = vcmp.eq.s32.totalorder %v281, 99
        %vm288 = vcmp.eq.s32.totalorder %v282, 99
        %vm289 = vmor %vm285, %vm287
        %vm290 = vmor %vm286, %vm288
        %v291 = vld [vmem:[%s228] sm:$0xff]
        %v292 = vld [vmem:[%s228 + $0x8] sm:$0xff]
        %v293 = vld [vmem:[%s228 + $0x10] sm:$0xff]
        %v294 = vld [vmem:[%s228 + $0x18] sm:$0xff]
        %v295 = vld [vmem:[%s228 + $0x20] sm:$0xff]
        %v296 = vld [vmem:[%s228 + $0x28] sm:$0xff]
        %v297 = vmax.f32 %v291, 0.0
        %v298 = vmax.f32 %v292, 0.0
        %v299 = vmax.f32 %v293, 0.0
        %v300 = vmax.f32 %v294, 0.0
        %v301 = vmax.f32 %v295, 0.0
        %v302 = vmax.f32 %v296, 0.0
        %v303 = vpack.c.bf16 %v299, %v297
        %v304 = vpack.c.bf16 %v300, %v298
        %v305 = vpack.c.bf16 %v301, %v301
        %v306 = vpack.c.bf16 %v302, %v302
        %v307 = vld [vmem:[%s2] sm:$0xff]
        %v308 = vld [vmem:[%s2 + $0x8] sm:$0xff]
        %v309 = vld [vmem:[%s2 + $0x10] sm:$0xff]
        %v310 = vld [vmem:[%s1] sm:$0xf]
        %v311 = vld [vmem:[%s1 + $0x4] sm:$0xf]
        %v312 = vld [vmem:[%s1 + $0x8] sm:$0xf]
        %v313 = vld [vmem:[%s1 + $0xc] sm:$0xf]
        %v314 = vld [vmem:[%s1 + $0x10] sm:$0xf]
        %v315 = vld [vmem:[%s1 + $0x14] sm:$0xf]
        %v316 = vld [vmem:[%s1 + $0x18] sm:$0xf]
        %v317 = vld [vmem:[%s1 + $0x1c] sm:$0xf]
        %v318 = vld [vmem:[%s1 + $0x20] sm:$0xf]
        %v328 = vunpack.c.l.b16 %v310
        %v329 = vunpack.c.l.b16 %v311
        %v330 = vunpack.c.l.b16 %v312
        %v331 = vunpack.c.l.b16 %v313
        %v332 = vunpack.c.l.b16 %v314
        %v333 = vunpack.c.l.b16 %v315
        %v334 = vunpack.c.l.b16 %v316
        %v335 = vunpack.c.l.b16 %v317
        %v336 = vunpack.c.l.b16 %v318
        %v337 = vpack.c.b16 %v329, %v328
        %v338 = vpack.c.b16 %v331, %v330
        %v339 = vpack.c.b16 %v333, %v332
        %v340 = vpack.c.b16 %v335, %v334
        %v341 = vpack.c.b16 %v336, %v336
        %vm342 = vcmask 195584
        %v344 = vsel %vm342, %v337, 0
        %v347 = vsel %vm342, %v338, 0
        %v350 = vsel %vm342, %v339, 0
        %v353 = vsel %vm342, %v340, 0
        %v356 = vsel %vm342, %v341, 0
        %vm358 = vcmask 1043456
        %v360 = vsel %vm358, %v305, 0
        %v363 = vsel %vm358, %v306, 0
        %365 = vmatprep.subr.bf16.mxu0 %v304
        %366 = vmatpush1.bf16.msra.mxu0 %v303
        %367 = vmatprep.subr.bf16.mxu0 %v363
        %368 = vmatpush1.bf16.msra.mxu0 %v360
        %369 = vmatprep.subr.bf16.mxu0 0
        %370 = vmatpush1.bf16.msra.mxu0 0
        %371 = vmatprep.subr.bf16.mxu0 0
        %372 = vmatpush1.bf16.msra.mxu0 0
        %373 = vmatprep.subr.bf16.mxu0 0
        %374 = vmatpush1.bf16.msra.mxu0 0
        %375 = vmatprep.subr.bf16.mxu0 0
        %376 = vmatpush1.bf16.msra.mxu0 0
        %377 = vmatprep.subr.bf16.mxu0 0
        %378 = vmatpush1.bf16.msra.mxu0 0
        %379 = vmatprep.subr.bf16.mxu0 0
        %380 = vmatpush1.bf16.msra.mxu0 0
        %381 = vmatprep.subr.bf16.mxu0 0
        %382 = vmatpush1.bf16.msra.mxu0 0
        %383 = vmatprep.subr.bf16.mxu0 0
        %384 = vmatpush1.bf16.msra.mxu0 0
        %385 = vmatprep.subr.bf16.mxu0 0
        %386 = vmatpush1.bf16.msra.mxu0 0
        %387 = vmatprep.subr.bf16.mxu0 0
        %388 = vmatpush1.bf16.msra.mxu0 0
        %389 = vmatprep.subr.bf16.mxu0 0
        %390 = vmatpush1.bf16.msra.mxu0 0
        %391 = vmatprep.subr.bf16.mxu0 0
        %392 = vmatpush1.bf16.msra.mxu0 0
        %393 = vmatprep.subr.bf16.mxu0 0
        %394 = vmatpush1.bf16.msra.mxu0 0
        %395 = vmatprep.subr.bf16.mxu0 0
        %396 = vmatpush1.bf16.msra.mxu0 0
        %397 = vmatprep.mubr.bf16.mxu0 0
        %398 = vmatmul.mubr.bf16.gmra.mrb[0].mxu0 %v344
        %v399 = vpop.f32.mrb[0].mxu0
        %v400 = vadd.f32 0.0, %v399
        %v401 = vpop.f32.mrb[0].mxu0
        %v402 = vadd.f32 0.0, %v401
        %v403 = vpop.f32.mrb[0].mxu0
        %v404 = vadd.f32 0.0, %v403
        %v405 = vpop.f32.mrb[0].mxu0
        %v406 = vadd.f32 0.0, %v405
        %407 = vmatprep.mubr.bf16.mxu0 0
        %408 = vmatmul.mubr.bf16.gmra.mrb[0].mxu0 %v347
        %v409 = vpop.f32.mrb[0].mxu0
        %v410 = vadd.f32 0.0, %v409
        %v411 = vpop.f32.mrb[0].mxu0
        %v412 = vadd.f32 0.0, %v411
        %v413 = vpop.f32.mrb[0].mxu0
        %v414 = vadd.f32 0.0, %v413
        %v415 = vpop.f32.mrb[0].mxu0
        %v416 = vadd.f32 0.0, %v415
        %417 = vmatprep.mubr.bf16.mxu0 0
        %418 = vmatmul.mubr.bf16.gmra.mrb[0].mxu0 %v350
        %v419 = vpop.f32.mrb[0].mxu0
        %v420 = vadd.f32 0.0, %v419
        %v421 = vpop.f32.mrb[0].mxu0
        %v422 = vadd.f32 0.0, %v421
        %v423 = vpop.f32.mrb[0].mxu0
        %v424 = vadd.f32 0.0, %v423
        %v425 = vpop.f32.mrb[0].mxu0
        %v426 = vadd.f32 0.0, %v425
        %427 = vmatprep.mubr.bf16.mxu0 0
        %428 = vmatmul.mubr.bf16.gmra.mrb[0].mxu0 %v353
        %v429 = vpop.f32.mrb[0].mxu0
        %v430 = vadd.f32 0.0, %v429
        %v431 = vpop.f32.mrb[0].mxu0
        %v432 = vadd.f32 0.0, %v431
        %v433 = vpop.f32.mrb[0].mxu0
        %v434 = vadd.f32 0.0, %v433
        %v435 = vpop.f32.mrb[0].mxu0
        %v436 = vadd.f32 0.0, %v435
        %437 = vmatprep.mubr.bf16.mxu0 0
        %438 = vmatmul.mubr.bf16.gmra.mrb[0].mxu0 %v356
        %v439 = vpop.f32.mrb[0].mxu0
        %v440 = vadd.f32 0.0, %v439
        %v441 = vpop.f32.mrb[0].mxu0
        %v442 = vadd.f32 0.0, %v441
        %v443 = vpop.f32.mrb[0].mxu0
        %v444 = vpop.f32.mrb[0].mxu0
        %445 = vdwg.mxu0
        %446 = vrot.lane.b32.xlu0 %v400, 1
        %v447 = vpop.permute.xlu0 %446
        %448 = vrot.lane.b32.xlu0 %v404, 1
        %v449 = vpop.permute.xlu0 %448
        %450 = vrot.lane.b32.xlu0 %v410, 1
        %v451 = vpop.permute.xlu0 %450
        %452 = vrot.lane.b32.xlu0 %v402, 1
        %v453 = vpop.permute.xlu0 %452
        %454 = vrot.lane.b32.xlu0 %v406, 1
        %v455 = vpop.permute.xlu0 %454
        %456 = vrot.lane.b32.xlu0 %v412, 1
        %v457 = vpop.permute.xlu0 %456
        %vm458 = vcmp.lt.s32.totalorder %v257, 1
        %v459 = vsel %vm458, %v447, %v453
        %v460 = vsel %vm458, %v449, %v455
        %v461 = vsel %vm458, %v451, %v457
        %v462 = vsel %vm458, %v453, %v447
        %v463 = vsel %vm458, %v455, %v449
        %v464 = vsel %vm458, %v457, %v451
        %v465 = vsel %vm283, 1, 0
        %v466 = vsel %vm284, 1, 0
        %vm467 = vcmp.eq.s32.totalorder %v465, 1
        %vm468 = vcmp.eq.s32.totalorder %v466, 1
        %v469 = vsel %vm467, 0.0, %v462
        %v470 = vsel %vm468, 0.0, %v459
        %v471 = vsel %vm467, 0.0, %v463
        %v472 = vsel %vm468, 0.0, %v460
        %v473 = vsel %vm467, 0.0, %v464
        %v474 = vsel %vm468, 0.0, %v461
        %475 = vrot.lane.b32.xlu0 %v430, 127
        %v476 = vpop.permute.xlu0 %475
        %477 = vrot.lane.b32.xlu0 %v434, 127
        %v478 = vpop.permute.xlu0 %477
        %479 = vrot.lane.b32.xlu0 %v440, 127
        %v480 = vpop.permute.xlu0 %479
        %481 = vrot.lane.b32.xlu0 %v432, 127
        %v482 = vpop.permute.xlu0 %481
        %483 = vrot.lane.b32.xlu0 %v436, 127
        %v484 = vpop.permute.xlu0 %483
        %485 = vrot.lane.b32.xlu0 %v442, 127
        %v486 = vpop.permute.xlu0 %485
        %vm487 = vcmp.lt.s32.totalorder %v257, 127
        %v488 = vsel %vm487, %v476, %v482
        %v489 = vsel %vm487, %v478, %v484
        %v490 = vsel %vm487, %v480, %v486
        %v491 = vsel %vm487, %v482, %v476
        %v492 = vsel %vm487, %v484, %v478
        %v493 = vsel %vm487, %v486, %v480
        %v494 = vsel %vm289, 1, 0
        %v495 = vsel %vm290, 1, 0
        %vm496 = vcmp.eq.s32.totalorder %v494, 1
        %vm497 = vcmp.eq.s32.totalorder %v495, 1
        %v498 = vsel %vm496, 0.0, %v488
        %v499 = vsel %vm497, 0.0, %v491
        %v500 = vsel %vm496, 0.0, %v489
        %v501 = vsel %vm497, 0.0, %v492
        %v502 = vsel %vm496, 0.0, %v490
        %v503 = vsel %vm497, 0.0, %v493
        %v504 = vadd.f32 %v469, %v414
        %v505 = vadd.f32 %v470, %v416
        %v506 = vadd.f32 %v471, %v420
        %v507 = vadd.f32 %v472, %v422
        %v508 = vadd.f32 %v473, %v424
        %v509 = vadd.f32 %v474, %v426
        %v510 = vadd.f32 %v504, %v498
        %v511 = vadd.f32 %v505, %v499
        %v512 = vadd.f32 %v506, %v500
        %v513 = vadd.f32 %v507, %v501
        %v514 = vadd.f32 %v508, %v502
        %v515 = vadd.f32 %v509, %v503
        %517 = vset.pattern.permute.xlu0 0
        %518 = vperm.xlu0 %517, %v307
        %v519 = vpop.permute.xlu0 %518
        %522 = vset.pattern.permute.xlu0 0
        %523 = vperm.xlu0 %522, %v308
        %v524 = vpop.permute.xlu0 %523
        %527 = vset.pattern.permute.xlu0 0
        %528 = vperm.xlu0 %527, %v309
        %v529 = vpop.permute.xlu0 %528
        %v531 = vadd.f32 %v510, %v519
        %v532 = vadd.f32 %v511, %v519
        %v533 = vadd.f32 %v512, %v524
        %v534 = vadd.f32 %v513, %v524
        %v535 = vadd.f32 %v514, %v529
        %v536 = vadd.f32 %v515, %v529
        %v537 = vld [vmem:[%s3] sm:$0xf]
        %v538 = vld [vmem:[%s3 + $0x4] sm:$0xf]
        %v539 = vld [vmem:[%s3 + $0x8] sm:$0xf]
        %v540 = vpack.c.bf16 %v533, %v531
        %v541 = vpack.c.bf16 %v534, %v532
        %v542 = vpack.c.bf16 %v535, %v535
        %v543 = vpack.c.bf16 %v536, %v536
        %544 = vset.pattern.permute.xlu0 1
        %545 = vperm.xlu0 %544, %v307
        %v546 = vpop.permute.xlu0 %545
        %548 = vset.pattern.permute.xlu0 1
        %549 = vperm.xlu0 %548, %v308
        %v550 = vpop.permute.xlu0 %549
        %552 = vset.pattern.permute.xlu0 1
        %553 = vperm.xlu0 %552, %v309
        %v554 = vpop.permute.xlu0 %553
        %v559 = vunpack.c.l.b16 %v537
        %v560 = vunpack.c.l.b16 %v538
        %v561 = vunpack.c.l.b16 %v539
        %v562 = vpack.c.b16 %v560, %v559
        %v563 = vpack.c.b16 %v561, %v561
        %v565 = vsel %vm342, %v562, 0
        %v568 = vsel %vm342, %v563, 0
        %v571 = vsel %vm358, %v542, 0
        %v574 = vsel %vm358, %v543, 0
        %576 = vmatprep.subr.bf16.mxu0 %v541
        %577 = vmatpush1.bf16.msra.mxu0 %v540
        %578 = vmatprep.subr.bf16.mxu0 %v574
        %579 = vmatpush1.bf16.msra.mxu0 %v571
        %580 = vmatprep.subr.bf16.mxu0 0
        %581 = vmatpush1.bf16.msra.mxu0 0
        %582 = vmatprep.subr.bf16.mxu0 0
        %583 = vmatpush1.bf16.msra.mxu0 0
        %584 = vmatprep.subr.bf16.mxu0 0
        %585 = vmatpush1.bf16.msra.mxu0 0
        %586 = vmatprep.subr.bf16.mxu0 0
        %587 = vmatpush1.bf16.msra.mxu0 0
        %588 = vmatprep.subr.bf16.mxu0 0
        %589 = vmatpush1.bf16.msra.mxu0 0
        %590 = vmatprep.subr.bf16.mxu0 0
        %591 = vmatpush1.bf16.msra.mxu0 0
        %592 = vmatprep.subr.bf16.mxu0 0
        %593 = vmatpush1.bf16.msra.mxu0 0
        %594 = vmatprep.subr.bf16.mxu0 0
        %595 = vmatpush1.bf16.msra.mxu0 0
        %596 = vmatprep.subr.bf16.mxu0 0
        %597 = vmatpush1.bf16.msra.mxu0 0
        %598 = vmatprep.subr.bf16.mxu0 0
        %599 = vmatpush1.bf16.msra.mxu0 0
        %600 = vmatprep.subr.bf16.mxu0 0
        %601 = vmatpush1.bf16.msra.mxu0 0
        %602 = vmatprep.subr.bf16.mxu0 0
        %603 = vmatpush1.bf16.msra.mxu0 0
        %604 = vmatprep.subr.bf16.mxu0 0
        %605 = vmatpush1.bf16.msra.mxu0 0
        %606 = vmatprep.subr.bf16.mxu0 0
        %607 = vmatpush1.bf16.msra.mxu0 0
        %608 = vmatprep.mubr.bf16.mxu0 0
        %609 = vmatmul.mubr.bf16.gmra.mrb[0].mxu0 %v565
        %v610 = vpop.f32.mrb[0].mxu0
        %v611 = vadd.f32 %v546, %v610
        %v612 = vpop.f32.mrb[0].mxu0
        %v613 = vadd.f32 %v546, %v612
        %v614 = vpop.f32.mrb[0].mxu0
        %v615 = vadd.f32 %v550, %v614
        %v616 = vpop.f32.mrb[0].mxu0
        %v617 = vadd.f32 %v550, %v616
        %618 = vmatprep.mubr.bf16.mxu0 0
        %619 = vmatmul.mubr.bf16.gmra.mrb[0].mxu0 %v568
        %v620 = vpop.f32.mrb[0].mxu0
        %v621 = vadd.f32 %v554, %v620
        %v622 = vpop.f32.mrb[0].mxu0
        %v623 = vadd.f32 %v554, %v622
        %v624 = vpop.f32.mrb[0].mxu0
        %v625 = vpop.f32.mrb[0].mxu0
        %626 = vdwg.mxu0
        %v627 = vmax.f32 %v611, 0.0
        %v628 = vmax.f32 %v613, 0.0
        %v629 = vmax.f32 %v615, 0.0
        %v630 = vmax.f32 %v617, 0.0
        %v631 = vmax.f32 %v621, 0.0
        %v632 = vmax.f32 %v623, 0.0
        %v633 = vld [vmem:[%s4] sm:$0xf]
        %v634 = vld [vmem:[%s4 + $0x4] sm:$0xf]
        %v635 = vld [vmem:[%s4 + $0x8] sm:$0xf]
        %v636 = vpack.c.bf16 %v629, %v627
        %v637 = vpack.c.bf16 %v630, %v628
        %v638 = vpack.c.bf16 %v631, %v631
        %v639 = vpack.c.bf16 %v632, %v632
        %640 = vset.pattern.permute.xlu0 2
        %641 = vperm.xlu0 %640, %v307
        %v642 = vpop.permute.xlu0 %641
        %644 = vset.pattern.permute.xlu0 2
        %645 = vperm.xlu0 %644, %v308
        %v646 = vpop.permute.xlu0 %645
        %648 = vset.pattern.permute.xlu0 2
        %649 = vperm.xlu0 %648, %v309
        %v650 = vpop.permute.xlu0 %649
        %v655 = vunpack.c.l.b16 %v633
        %v656 = vunpack.c.l.b16 %v634
        %v657 = vunpack.c.l.b16 %v635
        %v658 = vpack.c.b16 %v656, %v655
        %v659 = vpack.c.b16 %v657, %v657
        %v661 = vsel %vm342, %v658, 0
        %v664 = vsel %vm342, %v659, 0
        %v667 = vsel %vm358, %v638, 0
        %v670 = vsel %vm358, %v639, 0
        %672 = vmatprep.subr.bf16.mxu0 %v637
        %673 = vmatpush1.bf16.msra.mxu0 %v636
        %674 = vmatprep.subr.bf16.mxu0 %v670
        %675 = vmatpush1.bf16.msra.mxu0 %v667
        %676 = vmatprep.subr.bf16.mxu0 0
        %677 = vmatpush1.bf16.msra.mxu0 0
        %678 = vmatprep.subr.bf16.mxu0 0
        %679 = vmatpush1.bf16.msra.mxu0 0
        %680 = vmatprep.subr.bf16.mxu0 0
        %681 = vmatpush1.bf16.msra.mxu0 0
        %682 = vmatprep.subr.bf16.mxu0 0
        %683 = vmatpush1.bf16.msra.mxu0 0
        %684 = vmatprep.subr.bf16.mxu0 0
        %685 = vmatpush1.bf16.msra.mxu0 0
        %686 = vmatprep.subr.bf16.mxu0 0
        %687 = vmatpush1.bf16.msra.mxu0 0
        %688 = vmatprep.subr.bf16.mxu0 0
        %689 = vmatpush1.bf16.msra.mxu0 0
        %690 = vmatprep.subr.bf16.mxu0 0
        %691 = vmatpush1.bf16.msra.mxu0 0
        %692 = vmatprep.subr.bf16.mxu0 0
        %693 = vmatpush1.bf16.msra.mxu0 0
        %694 = vmatprep.subr.bf16.mxu0 0
        %695 = vmatpush1.bf16.msra.mxu0 0
        %696 = vmatprep.subr.bf16.mxu0 0
        %697 = vmatpush1.bf16.msra.mxu0 0
        %698 = vmatprep.subr.bf16.mxu0 0
        %699 = vmatpush1.bf16.msra.mxu0 0
        %700 = vmatprep.subr.bf16.mxu0 0
        %701 = vmatpush1.bf16.msra.mxu0 0
        %702 = vmatprep.subr.bf16.mxu0 0
        %703 = vmatpush1.bf16.msra.mxu0 0
        %704 = vmatprep.mubr.bf16.mxu0 0
        %705 = vmatmul.mubr.bf16.gmra.mrb[0].mxu0 %v661
        %v706 = vpop.f32.mrb[0].mxu0
        %v707 = vadd.f32 %v642, %v706
        %v708 = vpop.f32.mrb[0].mxu0
        %v709 = vadd.f32 %v642, %v708
        %v710 = vpop.f32.mrb[0].mxu0
        %v711 = vadd.f32 %v646, %v710
        %v712 = vpop.f32.mrb[0].mxu0
        %v713 = vadd.f32 %v646, %v712
        %714 = vmatprep.mubr.bf16.mxu0 0
        %715 = vmatmul.mubr.bf16.gmra.mrb[0].mxu0 %v664
        %v716 = vpop.f32.mrb[0].mxu0
        %v717 = vadd.f32 %v650, %v716
        %v718 = vpop.f32.mrb[0].mxu0
        %v719 = vadd.f32 %v650, %v718
        %v720 = vpop.f32.mrb[0].mxu0
        %v721 = vpop.f32.mrb[0].mxu0
        %722 = vdwg.mxu0
        %v723 = vadd.f32 %v707, %v291
        %v724 = vadd.f32 %v709, %v292
        %v725 = vadd.f32 %v711, %v293
        %v726 = vadd.f32 %v713, %v294
        %v727 = vadd.f32 %v717, %v295
        %v728 = vadd.f32 %v719, %v296
        %v729 = vmax.f32 %v723, 0.0
        %v730 = vmax.f32 %v724, 0.0
        %v731 = vmax.f32 %v725, 0.0
        %v732 = vmax.f32 %v726, 0.0
        %v733 = vmax.f32 %v727, 0.0
        %v734 = vmax.f32 %v728, 0.0
        %v735 = vpack.c.bf16 %v731, %v729
        %v736 = vpack.c.bf16 %v732, %v730
        %v737 = vpack.c.bf16 %v733, %v733
        %v738 = vpack.c.bf16 %v734, %v734
        %s739 = scalar_lea.vmem %s2, 24
        %v740 = vld [vmem:[%s739] sm:$0xff]
        %v741 = vld [vmem:[%s739 + $0x8] sm:$0xff]
        %v742 = vld [vmem:[%s739 + $0x10] sm:$0xff]
        %s743 = scalar_lea.vmem %s1, 36
        %v744 = vld [vmem:[%s743] sm:$0xf]
        %v745 = vld [vmem:[%s743 + $0x4] sm:$0xf]
        %v746 = vld [vmem:[%s743 + $0x8] sm:$0xf]
        %v747 = vld [vmem:[%s743 + $0xc] sm:$0xf]
        %v748 = vld [vmem:[%s743 + $0x10] sm:$0xf]
        %v749 = vld [vmem:[%s743 + $0x14] sm:$0xf]
        %v750 = vld [vmem:[%s743 + $0x18] sm:$0xf]
        %v751 = vld [vmem:[%s743 + $0x1c] sm:$0xf]
        %v752 = vld [vmem:[%s743 + $0x20] sm:$0xf]
        %v762 = vunpack.c.l.b16 %v744
        %v763 = vunpack.c.l.b16 %v745
        %v764 = vunpack.c.l.b16 %v746
        %v765 = vunpack.c.l.b16 %v747
        %v766 = vunpack.c.l.b16 %v748
        %v767 = vunpack.c.l.b16 %v749
        %v768 = vunpack.c.l.b16 %v750
        %v769 = vunpack.c.l.b16 %v751
        %v770 = vunpack.c.l.b16 %v752
        %v771 = vpack.c.b16 %v763, %v762
        %v772 = vpack.c.b16 %v765, %v764
        %v773 = vpack.c.b16 %v767, %v766
        %v774 = vpack.c.b16 %v769, %v768
        %v775 = vpack.c.b16 %v770, %v770
        %v777 = vsel %vm342, %v771, 0
        %v780 = vsel %vm342, %v772, 0
        %v783 = vsel %vm342, %v773, 0
        %v786 = vsel %vm342, %v774, 0
        %v789 = vsel %vm342, %v775, 0
        %v792 = vsel %vm358, %v737, 0
        %v795 = vsel %vm358, %v738, 0
        %797 = vmatprep.subr.bf16.mxu0 %v736
        %798 = vmatpush1.bf16.msra.mxu0 %v735
        %799 = vmatprep.subr.bf16.mxu0 %v795
        %800 = vmatpush1.bf16.msra.mxu0 %v792
        %801 = vmatprep.subr.bf16.mxu0 0
        %802 = vmatpush1.bf16.msra.mxu0 0
        %803 = vmatprep.subr.bf16.mxu0 0
        %804 = vmatpush1.bf16.msra.mxu0 0
        %805 = vmatprep.subr.bf16.mxu0 0
        %806 = vmatpush1.bf16.msra.mxu0 0
        %807 = vmatprep.subr.bf16.mxu0 0
        %808 = vmatpush1.bf16.msra.mxu0 0
        %809 = vmatprep.subr.bf16.mxu0 0
        %810 = vmatpush1.bf16.msra.mxu0 0
        %811 = vmatprep.subr.bf16.mxu0 0
        %812 = vmatpush1.bf16.msra.mxu0 0
        %813 = vmatprep.subr.bf16.mxu0 0
        %814 = vmatpush1.bf16.msra.mxu0 0
        %815 = vmatprep.subr.bf16.mxu0 0
        %816 = vmatpush1.bf16.msra.mxu0 0
        %817 = vmatprep.subr.bf16.mxu0 0
        %818 = vmatpush1.bf16.msra.mxu0 0
        %819 = vmatprep.subr.bf16.mxu0 0
        %820 = vmatpush1.bf16.msra.mxu0 0
        %821 = vmatprep.subr.bf16.mxu0 0
        %822 = vmatpush1.bf16.msra.mxu0 0
        %823 = vmatprep.subr.bf16.mxu0 0
        %824 = vmatpush1.bf16.msra.mxu0 0
        %825 = vmatprep.subr.bf16.mxu0 0
        %826 = vmatpush1.bf16.msra.mxu0 0
        %827 = vmatprep.subr.bf16.mxu0 0
        %828 = vmatpush1.bf16.msra.mxu0 0
        %829 = vmatprep.mubr.bf16.mxu0 0
        %830 = vmatmul.mubr.bf16.gmra.mrb[0].mxu0 %v777
        %v831 = vpop.f32.mrb[0].mxu0
        %v832 = vadd.f32 0.0, %v831
        %v833 = vpop.f32.mrb[0].mxu0
        %v834 = vadd.f32 0.0, %v833
        %v835 = vpop.f32.mrb[0].mxu0
        %v836 = vadd.f32 0.0, %v835
        %v837 = vpop.f32.mrb[0].mxu0
        %v838 = vadd.f32 0.0, %v837
        %839 = vmatprep.mubr.bf16.mxu0 0
        %840 = vmatmul.mubr.bf16.gmra.mrb[0].mxu0 %v780
        %v841 = vpop.f32.mrb[0].mxu0
        %v842 = vadd.f32 0.0, %v841
        %v843 = vpop.f32.mrb[0].mxu0
        %v844 = vadd.f32 0.0, %v843
        %v845 = vpop.f32.mrb[0].mxu0
        %v846 = vadd.f32 0.0, %v845
        %v847 = vpop.f32.mrb[0].mxu0
        %v848 = vadd.f32 0.0, %v847
        %849 = vmatprep.mubr.bf16.mxu0 0
        %850 = vmatmul.mubr.bf16.gmra.mrb[0].mxu0 %v783
        %v851 = vpop.f32.mrb[0].mxu0
        %v852 = vadd.f32 0.0, %v851
        %v853 = vpop.f32.mrb[0].mxu0
        %v854 = vadd.f32 0.0, %v853
        %v855 = vpop.f32.mrb[0].mxu0
        %v856 = vadd.f32 0.0, %v855
        %v857 = vpop.f32.mrb[0].mxu0
        %v858 = vadd.f32 0.0, %v857
        %859 = vmatprep.mubr.bf16.mxu0 0
        %860 = vmatmul.mubr.bf16.gmra.mrb[0].mxu0 %v786
        %v861 = vpop.f32.mrb[0].mxu0
        %v862 = vadd.f32 0.0, %v861
        %v863 = vpop.f32.mrb[0].mxu0
        %v864 = vadd.f32 0.0, %v863
        %v865 = vpop.f32.mrb[0].mxu0
        %v866 = vadd.f32 0.0, %v865
        %v867 = vpop.f32.mrb[0].mxu0
        %v868 = vadd.f32 0.0, %v867
        %869 = vmatprep.mubr.bf16.mxu0 0
        %870 = vmatmul.mubr.bf16.gmra.mrb[0].mxu0 %v789
        %v871 = vpop.f32.mrb[0].mxu0
        %v872 = vadd.f32 0.0, %v871
        %v873 = vpop.f32.mrb[0].mxu0
        %v874 = vadd.f32 0.0, %v873
        %v875 = vpop.f32.mrb[0].mxu0
        %v876 = vpop.f32.mrb[0].mxu0
        %877 = vdwg.mxu0
        %878 = vrot.lane.b32.xlu0 %v832, 1
        %v879 = vpop.permute.xlu0 %878
        %880 = vrot.lane.b32.xlu0 %v836, 1
        %v881 = vpop.permute.xlu0 %880
        %882 = vrot.lane.b32.xlu0 %v842, 1
        %v883 = vpop.permute.xlu0 %882
        %884 = vrot.lane.b32.xlu0 %v834, 1
        %v885 = vpop.permute.xlu0 %884
        %886 = vrot.lane.b32.xlu0 %v838, 1
        %v887 = vpop.permute.xlu0 %886
        %888 = vrot.lane.b32.xlu0 %v844, 1
        %v889 = vpop.permute.xlu0 %888
        %v890 = vsel %vm458, %v879, %v885
        %v891 = vsel %vm458, %v881, %v887
        %v892 = vsel %vm458, %v883, %v889
        %v893 = vsel %vm458, %v885, %v879
        %v894 = vsel %vm458, %v887, %v881
        %v895 = vsel %vm458, %v889, %v883
        %v896 = vsel %vm467, 0.0, %v893
        %v897 = vsel %vm468, 0.0, %v890
        %v898 = vsel %vm467, 0.0, %v894
        %v899 = vsel %vm468, 0.0, %v891
        %v900 = vsel %vm467, 0.0, %v895
        %v901 = vsel %vm468, 0.0, %v892
        %902 = vrot.lane.b32.xlu0 %v862, 127
        %v903 = vpop.permute.xlu0 %902
        %904 = vrot.lane.b32.xlu0 %v866, 127
        %v905 = vpop.permute.xlu0 %904
        %906 = vrot.lane.b32.xlu0 %v872, 127
        %v907 = vpop.permute.xlu0 %906
        %908 = vrot.lane.b32.xlu0 %v864, 127
        %v909 = vpop.permute.xlu0 %908
        %910 = vrot.lane.b32.xlu0 %v868, 127
        %v911 = vpop.permute.xlu0 %910
        %912 = vrot.lane.b32.xlu0 %v874, 127
        %v913 = vpop.permute.xlu0 %912
        %v914 = vsel %vm487, %v903, %v909
        %v915 = vsel %vm487, %v905, %v911
        %v916 = vsel %vm487, %v907, %v913
        %v917 = vsel %vm487, %v909, %v903
        %v918 = vsel %vm487, %v911, %v905
        %v919 = vsel %vm487, %v913, %v907
        %v920 = vsel %vm496, 0.0, %v914
        %v921 = vsel %vm497, 0.0, %v917
        %v922 = vsel %vm496, 0.0, %v915
        %v923 = vsel %vm497, 0.0, %v918
        %v924 = vsel %vm496, 0.0, %v916
        %v925 = vsel %vm497, 0.0, %v919
        %v926 = vadd.f32 %v896, %v846
        %v927 = vadd.f32 %v897, %v848
        %v928 = vadd.f32 %v898, %v852
        %v929 = vadd.f32 %v899, %v854
        %v930 = vadd.f32 %v900, %v856
        %v931 = vadd.f32 %v901, %v858
        %v932 = vadd.f32 %v926, %v920
        %v933 = vadd.f32 %v927, %v921
        %v934 = vadd.f32 %v928, %v922
        %v935 = vadd.f32 %v929, %v923
        %v936 = vadd.f32 %v930, %v924
        %v937 = vadd.f32 %v931, %v925
        %939 = vset.pattern.permute.xlu0 0
        %940 = vperm.xlu0 %939, %v740
        %v941 = vpop.permute.xlu0 %940
        %944 = vset.pattern.permute.xlu0 0
        %945 = vperm.xlu0 %944, %v741
        %v946 = vpop.permute.xlu0 %945
        %949 = vset.pattern.permute.xlu0 0
        %950 = vperm.xlu0 %949, %v742
        %v951 = vpop.permute.xlu0 %950
        %v953 = vadd.f32 %v932, %v941
        %v954 = vadd.f32 %v933, %v941
        %v955 = vadd.f32 %v934, %v946
        %v956 = vadd.f32 %v935, %v946
        %v957 = vadd.f32 %v936, %v951
        %v958 = vadd.f32 %v937, %v951
        %s959 = scalar_lea.vmem %s3, 12
        %v960 = vld [vmem:[%s959] sm:$0xf]
        %v961 = vld [vmem:[%s959 + $0x4] sm:$0xf]
        %v962 = vld [vmem:[%s959 + $0x8] sm:$0xf]
        %v963 = vpack.c.bf16 %v955, %v953
        %v964 = vpack.c.bf16 %v956, %v954
        %v965 = vpack.c.bf16 %v957, %v957
        %v966 = vpack.c.bf16 %v958, %v958
        %967 = vset.pattern.permute.xlu0 1
        %968 = vperm.xlu0 %967, %v740
        %v969 = vpop.permute.xlu0 %968
        %971 = vset.pattern.permute.xlu0 1
        %972 = vperm.xlu0 %971, %v741
        %v973 = vpop.permute.xlu0 %972
        %975 = vset.pattern.permute.xlu0 1
        %976 = vperm.xlu0 %975, %v742
        %v977 = vpop.permute.xlu0 %976
        %v982 = vunpack.c.l.b16 %v960
        %v983 = vunpack.c.l.b16 %v961
        %v984 = vunpack.c.l.b16 %v962
        %v985 = vpack.c.b16 %v983, %v982
        %v986 = vpack.c.b16 %v984, %v984
        %v988 = vsel %vm342, %v985, 0
        %v991 = vsel %vm342, %v986, 0
        %v994 = vsel %vm358, %v965, 0
        %v997 = vsel %vm358, %v966, 0
        %999 = vmatprep.subr.bf16.mxu0 %v964
        %1000 = vmatpush1.bf16.msra.mxu0 %v963
        %1001 = vmatprep.subr.bf16.mxu0 %v997
        %1002 = vmatpush1.bf16.msra.mxu0 %v994
        %1003 = vmatprep.subr.bf16.mxu0 0
        %1004 = vmatpush1.bf16.msra.mxu0 0
        %1005 = vmatprep.subr.bf16.mxu0 0
        %1006 = vmatpush1.bf16.msra.mxu0 0
        %1007 = vmatprep.subr.bf16.mxu0 0
        %1008 = vmatpush1.bf16.msra.mxu0 0
        %1009 = vmatprep.subr.bf16.mxu0 0
        %1010 = vmatpush1.bf16.msra.mxu0 0
        %1011 = vmatprep.subr.bf16.mxu0 0
        %1012 = vmatpush1.bf16.msra.mxu0 0
        %1013 = vmatprep.subr.bf16.mxu0 0
        %1014 = vmatpush1.bf16.msra.mxu0 0
        %1015 = vmatprep.subr.bf16.mxu0 0
        %1016 = vmatpush1.bf16.msra.mxu0 0
        %1017 = vmatprep.subr.bf16.mxu0 0
        %1018 = vmatpush1.bf16.msra.mxu0 0
        %1019 = vmatprep.subr.bf16.mxu0 0
        %1020 = vmatpush1.bf16.msra.mxu0 0
        %1021 = vmatprep.subr.bf16.mxu0 0
        %1022 = vmatpush1.bf16.msra.mxu0 0
        %1023 = vmatprep.subr.bf16.mxu0 0
        %1024 = vmatpush1.bf16.msra.mxu0 0
        %1025 = vmatprep.subr.bf16.mxu0 0
        %1026 = vmatpush1.bf16.msra.mxu0 0
        %1027 = vmatprep.subr.bf16.mxu0 0
        %1028 = vmatpush1.bf16.msra.mxu0 0
        %1029 = vmatprep.subr.bf16.mxu0 0
        %1030 = vmatpush1.bf16.msra.mxu0 0
        %1031 = vmatprep.mubr.bf16.mxu0 0
        %1032 = vmatmul.mubr.bf16.gmra.mrb[0].mxu0 %v988
        %v1033 = vpop.f32.mrb[0].mxu0
        %v1034 = vadd.f32 %v969, %v1033
        %v1035 = vpop.f32.mrb[0].mxu0
        %v1036 = vadd.f32 %v969, %v1035
        %v1037 = vpop.f32.mrb[0].mxu0
        %v1038 = vadd.f32 %v973, %v1037
        %v1039 = vpop.f32.mrb[0].mxu0
        %v1040 = vadd.f32 %v973, %v1039
        %1041 = vmatprep.mubr.bf16.mxu0 0
        %1042 = vmatmul.mubr.bf16.gmra.mrb[0].mxu0 %v991
        %v1043 = vpop.f32.mrb[0].mxu0
        %v1044 = vadd.f32 %v977, %v1043
        %v1045 = vpop.f32.mrb[0].mxu0
        %v1046 = vadd.f32 %v977, %v1045
        %v1047 = vpop.f32.mrb[0].mxu0
        %v1048 = vpop.f32.mrb[0].mxu0
        %1049 = vdwg.mxu0
        %v1050 = vmax.f32 %v1034, 0.0
        %v1051 = vmax.f32 %v1036, 0.0
        %v1052 = vmax.f32 %v1038, 0.0
        %v1053 = vmax.f32 %v1040, 0.0
        %v1054 = vmax.f32 %v1044, 0.0
        %v1055 = vmax.f32 %v1046, 0.0
        %s1056 = scalar_lea.vmem %s4, 12
        %v1057 = vld [vmem:[%s1056] sm:$0xf]
        %v1058 = vld [vmem:[%s1056 + $0x4] sm:$0xf]
        %v1059 = vld [vmem:[%s1056 + $0x8] sm:$0xf]
        %v1060 = vpack.c.bf16 %v1052, %v1050
        %v1061 = vpack.c.bf16 %v1053, %v1051
        %v1062 = vpack.c.bf16 %v1054, %v1054
        %v1063 = vpack.c.bf16 %v1055, %v1055
        %1064 = vset.pattern.permute.xlu0 2
        %1065 = vperm.xlu0 %1064, %v740
        %v1066 = vpop.permute.xlu0 %1065
        %1068 = vset.pattern.permute.xlu0 2
        %1069 = vperm.xlu0 %1068, %v741
        %v1070 = vpop.permute.xlu0 %1069
        %1072 = vset.pattern.permute.xlu0 2
        %1073 = vperm.xlu0 %1072, %v742
        %v1074 = vpop.permute.xlu0 %1073
        %v1079 = vunpack.c.l.b16 %v1057
        %v1080 = vunpack.c.l.b16 %v1058
        %v1081 = vunpack.c.l.b16 %v1059
        %v1082 = vpack.c.b16 %v1080, %v1079
        %v1083 = vpack.c.b16 %v1081, %v1081
        %v1085 = vsel %vm342, %v1082, 0
        %v1088 = vsel %vm342, %v1083, 0
        %v1091 = vsel %vm358, %v1062, 0
        %v1094 = vsel %vm358, %v1063, 0
        %1096 = vmatprep.subr.bf16.mxu0 %v1061
        %1097 = vmatpush1.bf16.msra.mxu0 %v1060
        %1098 = vmatprep.subr.bf16.mxu0 %v1094
        %1099 = vmatpush1.bf16.msra.mxu0 %v1091
        %1100 = vmatprep.subr.bf16.mxu0 0
        %1101 = vmatpush1.bf16.msra.mxu0 0
        %1102 = vmatprep.subr.bf16.mxu0 0
        %1103 = vmatpush1.bf16.msra.mxu0 0
        %1104 = vmatprep.subr.bf16.mxu0 0
        %1105 = vmatpush1.bf16.msra.mxu0 0
        %1106 = vmatprep.subr.bf16.mxu0 0
        %1107 = vmatpush1.bf16.msra.mxu0 0
        %1108 = vmatprep.subr.bf16.mxu0 0
        %1109 = vmatpush1.bf16.msra.mxu0 0
        %1110 = vmatprep.subr.bf16.mxu0 0
        %1111 = vmatpush1.bf16.msra.mxu0 0
        %1112 = vmatprep.subr.bf16.mxu0 0
        %1113 = vmatpush1.bf16.msra.mxu0 0
        %1114 = vmatprep.subr.bf16.mxu0 0
        %1115 = vmatpush1.bf16.msra.mxu0 0
        %1116 = vmatprep.subr.bf16.mxu0 0
        %1117 = vmatpush1.bf16.msra.mxu0 0
        %1118 = vmatprep.subr.bf16.mxu0 0
        %1119 = vmatpush1.bf16.msra.mxu0 0
        %1120 = vmatprep.subr.bf16.mxu0 0
        %1121 = vmatpush1.bf16.msra.mxu0 0
        %1122 = vmatprep.subr.bf16.mxu0 0
        %1123 = vmatpush1.bf16.msra.mxu0 0
        %1124 = vmatprep.subr.bf16.mxu0 0
        %1125 = vmatpush1.bf16.msra.mxu0 0
        %1126 = vmatprep.subr.bf16.mxu0 0
        %1127 = vmatpush1.bf16.msra.mxu0 0
        %1128 = vmatprep.mubr.bf16.mxu0 0
        %1129 = vmatmul.mubr.bf16.gmra.mrb[0].mxu0 %v1085
        %v1130 = vpop.f32.mrb[0].mxu0
        %v1131 = vadd.f32 %v1066, %v1130
        %v1132 = vpop.f32.mrb[0].mxu0
        %v1133 = vadd.f32 %v1066, %v1132
        %v1134 = vpop.f32.mrb[0].mxu0
        %v1135 = vadd.f32 %v1070, %v1134
        %v1136 = vpop.f32.mrb[0].mxu0
        %v1137 = vadd.f32 %v1070, %v1136
        %1138 = vmatprep.mubr.bf16.mxu0 0
        %1139 = vmatmul.mubr.bf16.gmra.mrb[0].mxu0 %v1088
        %v1140 = vpop.f32.mrb[0].mxu0
        %v1141 = vadd.f32 %v1074, %v1140
        %v1142 = vpop.f32.mrb[0].mxu0
        %v1143 = vadd.f32 %v1074, %v1142
        %v1144 = vpop.f32.mrb[0].mxu0
        %v1145 = vpop.f32.mrb[0].mxu0
        %1146 = vdwg.mxu0
        %v1147 = vadd.f32 %v1131, %v723
        %v1148 = vadd.f32 %v1133, %v724
        %v1149 = vadd.f32 %v1135, %v725
        %v1150 = vadd.f32 %v1137, %v726
        %v1151 = vadd.f32 %v1141, %v727
        %v1152 = vadd.f32 %v1143, %v728
        %v1153 = vmax.f32 %v1147, 0.0
        %v1154 = vmax.f32 %v1148, 0.0
        %v1155 = vmax.f32 %v1149, 0.0
        %v1156 = vmax.f32 %v1150, 0.0
        %v1157 = vmax.f32 %v1151, 0.0
        %v1158 = vmax.f32 %v1152, 0.0
        %v1159 = vpack.c.bf16 %v1155, %v1153
        %v1160 = vpack.c.bf16 %v1156, %v1154
        %v1161 = vpack.c.bf16 %v1157, %v1157
        %v1162 = vpack.c.bf16 %v1158, %v1158
        %s1163 = scalar_lea.vmem %s2, 48
        %v1164 = vld [vmem:[%s1163] sm:$0xff]
        %v1165 = vld [vmem:[%s1163 + $0x8] sm:$0xff]
        %v1166 = vld [vmem:[%s1163 + $0x10] sm:$0xff]
        %s1167 = scalar_lea.vmem %s1, 72
        %v1168 = vld [vmem:[%s1167] sm:$0xf]
        %v1169 = vld [vmem:[%s1167 + $0x4] sm:$0xf]
        %v1170 = vld [vmem:[%s1167 + $0x8] sm:$0xf]
        %v1171 = vld [vmem:[%s1167 + $0xc] sm:$0xf]
        %v1172 = vld [vmem:[%s1167 + $0x10] sm:$0xf]
        %v1173 = vld [vmem:[%s1167 + $0x14] sm:$0xf]
        %v1174 = vld [vmem:[%s1167 + $0x18] sm:$0xf]
        %v1175 = vld [vmem:[%s1167 + $0x1c] sm:$0xf]
        %v1176 = vld [vmem:[%s1167 + $0x20] sm:$0xf]
        %v1186 = vunpack.c.l.b16 %v1168
        %v1187 = vunpack.c.l.b16 %v1169
        %v1188 = vunpack.c.l.b16 %v1170
        %v1189 = vunpack.c.l.b16 %v1171
        %v1190 = vunpack.c.l.b16 %v1172
        %v1191 = vunpack.c.l.b16 %v1173
        %v1192 = vunpack.c.l.b16 %v1174
        %v1193 = vunpack.c.l.b16 %v1175
        %v1194 = vunpack.c.l.b16 %v1176
        %v1195 = vpack.c.b16 %v1187, %v1186
        %v1196 = vpack.c.b16 %v1189, %v1188
        %v1197 = vpack.c.b16 %v1191, %v1190
        %v1198 = vpack.c.b16 %v1193, %v1192
        %v1199 = vpack.c.b16 %v1194, %v1194
        %v1201 = vsel %vm342, %v1195, 0
        %v1204 = vsel %vm342, %v1196, 0
        %v1207 = vsel %vm342, %v1197, 0
        %v1210 = vsel %vm342, %v1198, 0
        %v1213 = vsel %vm342, %v1199, 0
        %v1216 = vsel %vm358, %v1161, 0
        %v1219 = vsel %vm358, %v1162, 0
        %1221 = vmatprep.subr.bf16.mxu0 %v1160
        %1222 = vmatpush1.bf16.msra.mxu0 %v1159
        %1223 = vmatprep.subr.bf16.mxu0 %v1219
        %1224 = vmatpush1.bf16.msra.mxu0 %v1216
        %1225 = vmatprep.subr.bf16.mxu0 0
        %1226 = vmatpush1.bf16.msra.mxu0 0
        %1227 = vmatprep.subr.bf16.mxu0 0
        %1228 = vmatpush1.bf16.msra.mxu0 0
        %1229 = vmatprep.subr.bf16.mxu0 0
        %1230 = vmatpush1.bf16.msra.mxu0 0
        %1231 = vmatprep.subr.bf16.mxu0 0
        %1232 = vmatpush1.bf16.msra.mxu0 0
        %1233 = vmatprep.subr.bf16.mxu0 0
        %1234 = vmatpush1.bf16.msra.mxu0 0
        %1235 = vmatprep.subr.bf16.mxu0 0
        %1236 = vmatpush1.bf16.msra.mxu0 0
        %1237 = vmatprep.subr.bf16.mxu0 0
        %1238 = vmatpush1.bf16.msra.mxu0 0
        %1239 = vmatprep.subr.bf16.mxu0 0
        %1240 = vmatpush1.bf16.msra.mxu0 0
        %1241 = vmatprep.subr.bf16.mxu0 0
        %1242 = vmatpush1.bf16.msra.mxu0 0
        %1243 = vmatprep.subr.bf16.mxu0 0
        %1244 = vmatpush1.bf16.msra.mxu0 0
        %1245 = vmatprep.subr.bf16.mxu0 0
        %1246 = vmatpush1.bf16.msra.mxu0 0
        %1247 = vmatprep.subr.bf16.mxu0 0
        %1248 = vmatpush1.bf16.msra.mxu0 0
        %1249 = vmatprep.subr.bf16.mxu0 0
        %1250 = vmatpush1.bf16.msra.mxu0 0
        %1251 = vmatprep.subr.bf16.mxu0 0
        %1252 = vmatpush1.bf16.msra.mxu0 0
        %1253 = vmatprep.mubr.bf16.mxu0 0
        %1254 = vmatmul.mubr.bf16.gmra.mrb[0].mxu0 %v1201
        %v1255 = vpop.f32.mrb[0].mxu0
        %v1256 = vadd.f32 0.0, %v1255
        %v1257 = vpop.f32.mrb[0].mxu0
        %v1258 = vadd.f32 0.0, %v1257
        %v1259 = vpop.f32.mrb[0].mxu0
        %v1260 = vadd.f32 0.0, %v1259
        %v1261 = vpop.f32.mrb[0].mxu0
        %v1262 = vadd.f32 0.0, %v1261
        %1263 = vmatprep.mubr.bf16.mxu0 0
        %1264 = vmatmul.mubr.bf16.gmra.mrb[0].mxu0 %v1204
        %v1265 = vpop.f32.mrb[0].mxu0
        %v1266 = vadd.f32 0.0, %v1265
        %v1267 = vpop.f32.mrb[0].mxu0
        %v1268 = vadd.f32 0.0, %v1267
        %v1269 = vpop.f32.mrb[0].mxu0
        %v1270 = vadd.f32 0.0, %v1269
        %v1271 = vpop.f32.mrb[0].mxu0
        %v1272 = vadd.f32 0.0, %v1271
        %1273 = vmatprep.mubr.bf16.mxu0 0
        %1274 = vmatmul.mubr.bf16.gmra.mrb[0].mxu0 %v1207
        %v1275 = vpop.f32.mrb[0].mxu0
        %v1276 = vadd.f32 0.0, %v1275
        %v1277 = vpop.f32.mrb[0].mxu0
        %v1278 = vadd.f32 0.0, %v1277
        %v1279 = vpop.f32.mrb[0].mxu0
        %v1280 = vadd.f32 0.0, %v1279
        %v1281 = vpop.f32.mrb[0].mxu0
        %v1282 = vadd.f32 0.0, %v1281
        %1283 = vmatprep.mubr.bf16.mxu0 0
        %1284 = vmatmul.mubr.bf16.gmra.mrb[0].mxu0 %v1210
        %v1285 = vpop.f32.mrb[0].mxu0
        %v1286 = vadd.f32 0.0, %v1285
        %v1287 = vpop.f32.mrb[0].mxu0
        %v1288 = vadd.f32 0.0, %v1287
        %v1289 = vpop.f32.mrb[0].mxu0
        %v1290 = vadd.f32 0.0, %v1289
        %v1291 = vpop.f32.mrb[0].mxu0
        %v1292 = vadd.f32 0.0, %v1291
        %1293 = vmatprep.mubr.bf16.mxu0 0
        %1294 = vmatmul.mubr.bf16.gmra.mrb[0].mxu0 %v1213
        %v1295 = vpop.f32.mrb[0].mxu0
        %v1296 = vadd.f32 0.0, %v1295
        %v1297 = vpop.f32.mrb[0].mxu0
        %v1298 = vadd.f32 0.0, %v1297
        %v1299 = vpop.f32.mrb[0].mxu0
        %v1300 = vpop.f32.mrb[0].mxu0
        %1301 = vdwg.mxu0
        %1302 = vrot.lane.b32.xlu0 %v1256, 1
        %v1303 = vpop.permute.xlu0 %1302
        %1304 = vrot.lane.b32.xlu0 %v1260, 1
        %v1305 = vpop.permute.xlu0 %1304
        %1306 = vrot.lane.b32.xlu0 %v1266, 1
        %v1307 = vpop.permute.xlu0 %1306
        %1308 = vrot.lane.b32.xlu0 %v1258, 1
        %v1309 = vpop.permute.xlu0 %1308
        %1310 = vrot.lane.b32.xlu0 %v1262, 1
        %v1311 = vpop.permute.xlu0 %1310
        %1312 = vrot.lane.b32.xlu0 %v1268, 1
        %v1313 = vpop.permute.xlu0 %1312
        %v1314 = vsel %vm458, %v1303, %v1309
        %v1315 = vsel %vm458, %v1305, %v1311
        %v1316 = vsel %vm458, %v1307, %v1313
        %v1317 = vsel %vm458, %v1309, %v1303
        %v1318 = vsel %vm458, %v1311, %v1305
        %v1319 = vsel %vm458, %v1313, %v1307
        %v1320 = vsel %vm467, 0.0, %v1317
        %v1321 = vsel %vm468, 0.0, %v1314
        %v1322 = vsel %vm467, 0.0, %v1318
        %v1323 = vsel %vm468, 0.0, %v1315
        %v1324 = vsel %vm467, 0.0, %v1319
        %v1325 = vsel %vm468, 0.0, %v1316
        %1326 = vrot.lane.b32.xlu0 %v1286, 127
        %v1327 = vpop.permute.xlu0 %1326
        %1328 = vrot.lane.b32.xlu0 %v1290, 127
        %v1329 = vpop.permute.xlu0 %1328
        %1330 = vrot.lane.b32.xlu0 %v1296, 127
        %v1331 = vpop.permute.xlu0 %1330
        %1332 = vrot.lane.b32.xlu0 %v1288, 127
        %v1333 = vpop.permute.xlu0 %1332
        %1334 = vrot.lane.b32.xlu0 %v1292, 127
        %v1335 = vpop.permute.xlu0 %1334
        %1336 = vrot.lane.b32.xlu0 %v1298, 127
        %v1337 = vpop.permute.xlu0 %1336
        %v1338 = vsel %vm487, %v1327, %v1333
        %v1339 = vsel %vm487, %v1329, %v1335
        %v1340 = vsel %vm487, %v1331, %v1337
        %v1341 = vsel %vm487, %v1333, %v1327
        %v1342 = vsel %vm487, %v1335, %v1329
        %v1343 = vsel %vm487, %v1337, %v1331
        %v1344 = vsel %vm496, 0.0, %v1338
        %v1345 = vsel %vm497, 0.0, %v1341
        %v1346 = vsel %vm496, 0.0, %v1339
        %v1347 = vsel %vm497, 0.0, %v1342
        %v1348 = vsel %vm496, 0.0, %v1340
        %v1349 = vsel %vm497, 0.0, %v1343
        %v1350 = vadd.f32 %v1320, %v1270
        %v1351 = vadd.f32 %v1321, %v1272
        %v1352 = vadd.f32 %v1322, %v1276
        %v1353 = vadd.f32 %v1323, %v1278
        %v1354 = vadd.f32 %v1324, %v1280
        %v1355 = vadd.f32 %v1325, %v1282
        %v1356 = vadd.f32 %v1350, %v1344
        %v1357 = vadd.f32 %v1351, %v1345
        %v1358 = vadd.f32 %v1352, %v1346
        %v1359 = vadd.f32 %v1353, %v1347
        %v1360 = vadd.f32 %v1354, %v1348
        %v1361 = vadd.f32 %v1355, %v1349
        %1363 = vset.pattern.permute.xlu0 0
        %1364 = vperm.xlu0 %1363, %v1164
        %v1365 = vpop.permute.xlu0 %1364
        %1368 = vset.pattern.permute.xlu0 0
        %1369 = vperm.xlu0 %1368, %v1165
        %v1370 = vpop.permute.xlu0 %1369
        %1373 = vset.pattern.permute.xlu0 0
        %1374 = vperm.xlu0 %1373, %v1166
        %v1375 = vpop.permute.xlu0 %1374
        %v1377 = vadd.f32 %v1356, %v1365
        %v1378 = vadd.f32 %v1357, %v1365
        %v1379 = vadd.f32 %v1358, %v1370
        %v1380 = vadd.f32 %v1359, %v1370
        %v1381 = vadd.f32 %v1360, %v1375
        %v1382 = vadd.f32 %v1361, %v1375
        %s1383 = scalar_lea.vmem %s3, 24
        %v1384 = vld [vmem:[%s1383] sm:$0xf]
        %v1385 = vld [vmem:[%s1383 + $0x4] sm:$0xf]
        %v1386 = vld [vmem:[%s1383 + $0x8] sm:$0xf]
        %v1387 = vpack.c.bf16 %v1379, %v1377
        %v1388 = vpack.c.bf16 %v1380, %v1378
        %v1389 = vpack.c.bf16 %v1381, %v1381
        %v1390 = vpack.c.bf16 %v1382, %v1382
        %1391 = vset.pattern.permute.xlu0 1
        %1392 = vperm.xlu0 %1391, %v1164
        %v1393 = vpop.permute.xlu0 %1392
        %1395 = vset.pattern.permute.xlu0 1
        %1396 = vperm.xlu0 %1395, %v1165
        %v1397 = vpop.permute.xlu0 %1396
        %1399 = vset.pattern.permute.xlu0 1
        %1400 = vperm.xlu0 %1399, %v1166
        %v1401 = vpop.permute.xlu0 %1400
        %v1406 = vunpack.c.l.b16 %v1384
        %v1407 = vunpack.c.l.b16 %v1385
        %v1408 = vunpack.c.l.b16 %v1386
        %v1409 = vpack.c.b16 %v1407, %v1406
        %v1410 = vpack.c.b16 %v1408, %v1408
        %v1412 = vsel %vm342, %v1409, 0
        %v1415 = vsel %vm342, %v1410, 0
        %v1418 = vsel %vm358, %v1389, 0
        %v1421 = vsel %vm358, %v1390, 0
        %1423 = vmatprep.subr.bf16.mxu0 %v1388
        %1424 = vmatpush1.bf16.msra.mxu0 %v1387
        %1425 = vmatprep.subr.bf16.mxu0 %v1421
        %1426 = vmatpush1.bf16.msra.mxu0 %v1418
        %1427 = vmatprep.subr.bf16.mxu0 0
        %1428 = vmatpush1.bf16.msra.mxu0 0
        %1429 = vmatprep.subr.bf16.mxu0 0
        %1430 = vmatpush1.bf16.msra.mxu0 0
        %1431 = vmatprep.subr.bf16.mxu0 0
        %1432 = vmatpush1.bf16.msra.mxu0 0
        %1433 = vmatprep.subr.bf16.mxu0 0
        %1434 = vmatpush1.bf16.msra.mxu0 0
        %1435 = vmatprep.subr.bf16.mxu0 0
        %1436 = vmatpush1.bf16.msra.mxu0 0
        %1437 = vmatprep.subr.bf16.mxu0 0
        %1438 = vmatpush1.bf16.msra.mxu0 0
        %1439 = vmatprep.subr.bf16.mxu0 0
        %1440 = vmatpush1.bf16.msra.mxu0 0
        %1441 = vmatprep.subr.bf16.mxu0 0
        %1442 = vmatpush1.bf16.msra.mxu0 0
        %1443 = vmatprep.subr.bf16.mxu0 0
        %1444 = vmatpush1.bf16.msra.mxu0 0
        %1445 = vmatprep.subr.bf16.mxu0 0
        %1446 = vmatpush1.bf16.msra.mxu0 0
        %1447 = vmatprep.subr.bf16.mxu0 0
        %1448 = vmatpush1.bf16.msra.mxu0 0
        %1449 = vmatprep.subr.bf16.mxu0 0
        %1450 = vmatpush1.bf16.msra.mxu0 0
        %1451 = vmatprep.subr.bf16.mxu0 0
        %1452 = vmatpush1.bf16.msra.mxu0 0
        %1453 = vmatprep.subr.bf16.mxu0 0
        %1454 = vmatpush1.bf16.msra.mxu0 0
        %1455 = vmatprep.mubr.bf16.mxu0 0
        %1456 = vmatmul.mubr.bf16.gmra.mrb[0].mxu0 %v1412
        %v1457 = vpop.f32.mrb[0].mxu0
        %v1458 = vadd.f32 %v1393, %v1457
        %v1459 = vpop.f32.mrb[0].mxu0
        %v1460 = vadd.f32 %v1393, %v1459
        %v1461 = vpop.f32.mrb[0].mxu0
        %v1462 = vadd.f32 %v1397, %v1461
        %v1463 = vpop.f32.mrb[0].mxu0
        %v1464 = vadd.f32 %v1397, %v1463
        %1465 = vmatprep.mubr.bf16.mxu0 0
        %1466 = vmatmul.mubr.bf16.gmra.mrb[0].mxu0 %v1415
        %v1467 = vpop.f32.mrb[0].mxu0
        %v1468 = vadd.f32 %v1401, %v1467
        %v1469 = vpop.f32.mrb[0].mxu0
        %v1470 = vadd.f32 %v1401, %v1469
        %v1471 = vpop.f32.mrb[0].mxu0
        %v1472 = vpop.f32.mrb[0].mxu0
        %1473 = vdwg.mxu0
        %v1474 = vmax.f32 %v1458, 0.0
        %v1475 = vmax.f32 %v1460, 0.0
        %v1476 = vmax.f32 %v1462, 0.0
        %v1477 = vmax.f32 %v1464, 0.0
        %v1478 = vmax.f32 %v1468, 0.0
        %v1479 = vmax.f32 %v1470, 0.0
        %s1480 = scalar_lea.vmem %s4, 24
        %v1481 = vld [vmem:[%s1480] sm:$0xf]
        %v1482 = vld [vmem:[%s1480 + $0x4] sm:$0xf]
        %v1483 = vld [vmem:[%s1480 + $0x8] sm:$0xf]
        %v1484 = vpack.c.bf16 %v1476, %v1474
        %v1485 = vpack.c.bf16 %v1477, %v1475
        %v1486 = vpack.c.bf16 %v1478, %v1478
        %v1487 = vpack.c.bf16 %v1479, %v1479
        %1488 = vset.pattern.permute.xlu0 2
        %1489 = vperm.xlu0 %1488, %v1164
        %v1490 = vpop.permute.xlu0 %1489
        %1492 = vset.pattern.permute.xlu0 2
        %1493 = vperm.xlu0 %1492, %v1165
        %v1494 = vpop.permute.xlu0 %1493
        %1496 = vset.pattern.permute.xlu0 2
        %1497 = vperm.xlu0 %1496, %v1166
        %v1498 = vpop.permute.xlu0 %1497
        %v1503 = vunpack.c.l.b16 %v1481
        %v1504 = vunpack.c.l.b16 %v1482
        %v1505 = vunpack.c.l.b16 %v1483
        %v1506 = vpack.c.b16 %v1504, %v1503
        %v1507 = vpack.c.b16 %v1505, %v1505
        %v1509 = vsel %vm342, %v1506, 0
        %v1512 = vsel %vm342, %v1507, 0
        %v1515 = vsel %vm358, %v1486, 0
        %v1518 = vsel %vm358, %v1487, 0
        %1520 = vmatprep.subr.bf16.mxu0 %v1485
        %1521 = vmatpush1.bf16.msra.mxu0 %v1484
        %1522 = vmatprep.subr.bf16.mxu0 %v1518
        %1523 = vmatpush1.bf16.msra.mxu0 %v1515
        %1524 = vmatprep.subr.bf16.mxu0 0
        %1525 = vmatpush1.bf16.msra.mxu0 0
        %1526 = vmatprep.subr.bf16.mxu0 0
        %1527 = vmatpush1.bf16.msra.mxu0 0
        %1528 = vmatprep.subr.bf16.mxu0 0
        %1529 = vmatpush1.bf16.msra.mxu0 0
        %1530 = vmatprep.subr.bf16.mxu0 0
        %1531 = vmatpush1.bf16.msra.mxu0 0
        %1532 = vmatprep.subr.bf16.mxu0 0
        %1533 = vmatpush1.bf16.msra.mxu0 0
        %1534 = vmatprep.subr.bf16.mxu0 0
        %1535 = vmatpush1.bf16.msra.mxu0 0
        %1536 = vmatprep.subr.bf16.mxu0 0
        %1537 = vmatpush1.bf16.msra.mxu0 0
        %1538 = vmatprep.subr.bf16.mxu0 0
        %1539 = vmatpush1.bf16.msra.mxu0 0
        %1540 = vmatprep.subr.bf16.mxu0 0
        %1541 = vmatpush1.bf16.msra.mxu0 0
        %1542 = vmatprep.subr.bf16.mxu0 0
        %1543 = vmatpush1.bf16.msra.mxu0 0
        %1544 = vmatprep.subr.bf16.mxu0 0
        %1545 = vmatpush1.bf16.msra.mxu0 0
        %1546 = vmatprep.subr.bf16.mxu0 0
        %1547 = vmatpush1.bf16.msra.mxu0 0
        %1548 = vmatprep.subr.bf16.mxu0 0
        %1549 = vmatpush1.bf16.msra.mxu0 0
        %1550 = vmatprep.subr.bf16.mxu0 0
        %1551 = vmatpush1.bf16.msra.mxu0 0
        %1552 = vmatprep.mubr.bf16.mxu0 0
        %1553 = vmatmul.mubr.bf16.gmra.mrb[0].mxu0 %v1509
        %v1554 = vpop.f32.mrb[0].mxu0
        %v1555 = vadd.f32 %v1490, %v1554
        %v1556 = vpop.f32.mrb[0].mxu0
        %v1557 = vadd.f32 %v1490, %v1556
        %v1558 = vpop.f32.mrb[0].mxu0
        %v1559 = vadd.f32 %v1494, %v1558
        %v1560 = vpop.f32.mrb[0].mxu0
        %v1561 = vadd.f32 %v1494, %v1560
        %1562 = vmatprep.mubr.bf16.mxu0 0
        %1563 = vmatmul.mubr.bf16.gmra.mrb[0].mxu0 %v1512
        %v1564 = vpop.f32.mrb[0].mxu0
        %v1565 = vadd.f32 %v1498, %v1564
        %v1566 = vpop.f32.mrb[0].mxu0
        %v1567 = vadd.f32 %v1498, %v1566
        %v1568 = vpop.f32.mrb[0].mxu0
        %v1569 = vpop.f32.mrb[0].mxu0
        %1570 = vdwg.mxu0
        %v1571 = vadd.f32 %v1555, %v1147
        %v1572 = vadd.f32 %v1557, %v1148
        %v1573 = vadd.f32 %v1559, %v1149
        %v1574 = vadd.f32 %v1561, %v1150
        %v1575 = vadd.f32 %v1565, %v1151
        %v1576 = vadd.f32 %v1567, %v1152
        %1577 = vst [vmem:[%s252] sm:$0xff] %v1571
        %1578 = vst [vmem:[%s252 + $0x8] sm:$0xff] %v1572
        %1579 = vst [vmem:[%s252 + $0x10] sm:$0xff] %v1573
        %1580 = vst [vmem:[%s252 + $0x18] sm:$0xff] %v1574
        %1581 = vst [vmem:[%s252 + $0x20] sm:$0xff] %v1575
        %1582 = vst [vmem:[%s252 + $0x28] sm:$0xff] %v1576
        %s1583 = sand.u32 %s137, 1
        %s1584 = scalar_lea.sflag [#allocation4], %s1583
        %s1585 = sand.u32 %s137, 1
        %s1586 = smul.addr %s1585, 48
        %s1587 = scalar_lea.vmem [#allocation3], %s1586
        // Predicated region
        $region64: #{tpu_custom_call.1} parent=58 // pred_check
          %p1588 = pneg %p147
        $region65: #{tpu_custom_call.1} parent=58 // pred_check_branch
          %1590 = sbr.rel (%p1588) target = $region67
        $region66: #{tpu_custom_call.1} parent=58 // pred_region
          %s1591 = smul.u32 2, %s19
          %s1593 = ssub.s32 768, 768
          %1594 = vsyncadd %s1584, %s1593
          %s1595 = smul.addr %s1591, 128
          %s1596 = scalar_lea.hbm %s5, %s1595
          %s1597 = sshll.u32 %s1587, 4
          %s1598 = int_to_ptr.vmem [resolvable:$true] %s1597
          %1603 = dma.vmem_to_hbm [thread:$0]  %s1598, 768, %s1596, %s1584, 256, 512, 16
        $region67: #{tpu_custom_call.1} parent=58 // pred_fallthru
          _
      $region59: #{tpu_custom_call.1} parent=5 // pred_fallthru
        _
      %p1604 = scmp.le.s32.totalorder 2, %s14
      // Predicated region
      $region68: #{tpu_custom_call.1} parent=5 // pred_check
        %p1605 = pneg %p1604
      $region69: #{tpu_custom_call.1} parent=5 // pred_check_branch
        %1607 = sbr.rel (%p1605) target = $region71
      $region70: #{tpu_custom_call.1} parent=5 // pred_region
        %s1608 = ssub.s32 %s14, 2
        // Predicated region
        $region72: #{tpu_custom_call.1} parent=70 // pred_check
          %p1609 = pneg %p153
        $region73: #{tpu_custom_call.1} parent=70 // pred_check_branch
          %1611 = sbr.rel (%p1609) target = $region75
        $region74: #{tpu_custom_call.1} parent=70 // pred_region
          %s1612 = sand.u32 %s138, 1
          %s1613 = scalar_lea.sflag [#allocation4], %s1612
          %s1614 = sand.u32 %s138, 1
          %s1615 = smul.addr %s1614, 48
          %s1616 = scalar_lea.vmem [#allocation3], %s1615
          %1617 = dma.done %s1613, 768
        $region75: #{tpu_custom_call.1} parent=70 // pred_fallthru
          _
      $region71: #{tpu_custom_call.1} parent=5 // pred_fallthru
        _
    $region6: #{tpu_custom_call.1} parent=1 // loop_footer
      %s18 = sadd.s32 1, %s14
    $region7: #{tpu_custom_call.1} parent=1 // loop_footer_branch
      %13 = sbr.rel target = $region3
    $region8: #{tpu_custom_call.1} parent=1 // loop_exit
      _
    %1618 = vsyncpa [#allocation4], 1
    %s1619 = scalar_lea.sflag [#allocation4], 1
    %1620 = vsyncpa %s1619, 1

</llo_original>
